<compile_context>
chip_gen: v7x
topology: tpu7x:2x2x1
jax: 0.10.0
libtpu: 0.0.40
codegen_flags: <defaults>
</compile_context>

<pallas_src>
import functools

import jax
import jax.numpy as jnp
from jax.experimental import pallas as pl
from jax.experimental.pallas import tpu as pltpu

C_IN = 64     # input channels
C_OUT = 128   # output channels
H = 28
W = 28
HW = H * W
KS = 3        # conv taps along W


def _conv_combine_kernel(x_ref, w2_ref, w1_ref, o_ref, *, roll0, col0, roll1, col1):
    # x_ref : (64, 784)    native NCHW-flat input, row j, column hw = h*28 + w
    # w2_ref: (128, 192)   w2r[i, k*64 + j] = W2[i, j, k]
    # w1_ref: (128, 2)
    # o_ref : (128, 784)   NCHW-flat output y[i, h*28 + w]
    x = x_ref[...]

    # --- 1x3 conv over W (zero padded): +/-1 lane rolls + boundary mask --------------
    # One narrow (1, 784) w-index row, reused for both edge masks (broadcast over
    # sublanes inside jnp.where), instead of a full (784, C) int modulo.
    w_idx = jax.lax.broadcasted_iota(jnp.int32, (1, HW), 1) % W
    x_l = jnp.where(w_idx == 0, 0.0, jnp.roll(x, 1, axis=1))       # x[j, h, w-1]
    x_r = jnp.where(w_idx == W - 1, 0.0, jnp.roll(x, -1, axis=1))  # x[j, h, w+1]

    # --- single fused-K MXU pass: (128, 192) @ (192, 784) ----------------------------
    # Sublane concat at 64-row (8-aligned) offsets; pairs with w2r's [tap, channel]
    # column ordering so one dot replaces three K=64 dots.
    xcat = jnp.concatenate([x_l, x, x_r], axis=0)                  # (192, 784)
    t4 = jnp.dot(w2_ref[...], xcat, preferred_element_type=jnp.float32)  # (128, 784)

    # --- H-roll combine with W1, on the VPU (no diag matmuls, exact f32) -------------
    # Lane rolls by multiples of 28 along the flat hw axis reproduce the torch
    # wraparound over h exactly: h*28 + w - 28 = (h-1)*28 + w (mod 784).
    y = (w1_ref[:, col0:col0 + 1] * jnp.roll(t4, roll0, axis=1)
         + w1_ref[:, col1:col1 + 1] * jnp.roll(t4, roll1, axis=1))
    o_ref[...] = y                                                 # (128, 784), NCHW-flat


@functools.partial(jax.jit, static_argnames=("shift_direction",))
def kernel_generated_1_forward(x, w1, w2, shift_direction=1):
    """x: (1,64,28,28) f32, w1: (128,2), w2: (128,64,3) -> (1,128,28,28) f32."""
    assert x.shape == (1, C_IN, H, W)

    # Free, layout-preserving reshape (no XLA transpose of x any more).
    x2d = x.astype(jnp.float32).reshape(C_IN, HW)                        # (64, 784)
    # Tiny (98 KiB) weight re-layout: w2r[i, k*64 + j] = W2[i, j, k].
    w2r = jnp.transpose(w2.astype(jnp.float32), (0, 2, 1)).reshape(C_OUT, KS * C_IN)
    w1f = w1.astype(jnp.float32)                                         # (128, 2)

    # Closed form of the two torch.rolls + reshapes + sum (see module-level comment).
    if shift_direction == 1:
        roll0, col0, roll1, col1 = W, 0, 2 * W, 1
    else:
        roll0, col0, roll1, col1 = -W, 1, -2 * W, 0

    out = pl.pallas_call(
        functools.partial(_conv_combine_kernel,
                          roll0=roll0, col0=col0, roll1=roll1, col1=col1),
        out_shape=jax.ShapeDtypeStruct((C_OUT, HW), jnp.float32),
        grid_spec=pltpu.PrefetchScalarGridSpec(
            num_scalar_prefetch=0,
            grid=(1,),
            in_specs=[
                pl.BlockSpec((C_IN, HW), lambda i: (0, 0)),
                pl.BlockSpec((C_OUT, KS * C_IN), lambda i: (0, 0)),
                pl.BlockSpec((C_OUT, 2), lambda i: (0, 0)),
            ],
            out_specs=pl.BlockSpec((C_OUT, HW), lambda i: (0, 0)),
        ),
        compiler_params=pltpu.CompilerParams(
            dimension_semantics=("arbitrary",)),
    )(x2d, w2r, w1f)

    # Already NCHW-flat: this reshape is free.
    return out.reshape(1, C_OUT, H, W)


def reference_forward(x, w1, w2, shift_direction):
    """Literal jnp translation of the torch forward, used as a correctness oracle."""
    x = x.astype(jnp.float32)
    w1 = w1.astype(jnp.float32)
    w2 = w2.astype(jnp.float32)
    t3 = x.reshape(1, C_IN * H, W, 1)
    t3p = jnp.pad(t3, ((0, 0), (0, 0), (1, 1), (0, 0)))
    # F.unfold with kernel (3,1), padding (1,0): (1, C_IN*H*3, 28)
    cols = jnp.stack([t3p[0, :, l:l + KS, 0] for l in range(W)], axis=-1)  # (1792, 3, 28)
    t3u = cols.reshape(1, C_IN * H * KS, W)
    t3r = t3u.reshape(1, C_IN, H, KS, W)
    t4 = jnp.einsum('ljnkm,ijk->linm', t3r, w2, precision=jax.lax.Precision.HIGHEST)
    t5 = jnp.einsum('kiml,ij->kimjl', t4, w1, precision=jax.lax.Precision.HIGHEST)
    t6 = jnp.roll(t5, shift_direction, axis=2)
    t6 = t6.reshape(1, C_OUT, 2 * H, W)
    t6 = jnp.roll(t6, shift_direction, axis=2)
    t6 = t6.reshape(1, C_OUT, H, 2, W)
    return t6.sum(axis=3)


if __name__ == "__main__":
    key = jax.random.PRNGKey(0)
    kx, k1, k2 = jax.random.split(key, 3)
    # Deterministic "randn"-style inputs at the shapes the module implies.
    x = jax.random.normal(kx, (1, C_IN, H, W), jnp.float32)
    w1 = jax.random.normal(k1, (C_OUT, 2), jnp.float32)          # self.weights[0]
    w2 = jax.random.normal(k2, (C_OUT, C_IN, KS), jnp.float32)   # self.weights[1]

    # Validate BOTH shift directions (the torch module picks +/-1 at random in __init__).
    for s in (1, -1):
        y = jax.block_until_ready(kernel_generated_1_forward(x, w1, w2, shift_direction=s))
        y_ref = reference_forward(x, w1, w2, s)
        assert y.shape == (1, C_OUT, H, W)
        err = float(jnp.max(jnp.abs(y - y_ref)))
        scale = float(jnp.max(jnp.abs(y_ref)))
        # Tolerance sized for the default-precision MXU conv pass (the W1 combine is
        # now exact f32 on the VPU); logic errors would be O(scale).
        assert err <= 2e-2 * scale + 1e-4, (s, err, scale)

    print("KERNEL_OK")
</pallas_src>

<mosaic_0001>
module attributes {stable_mosaic.version = 11 : i64} {
  func.func @_conv_combine_kernel(%arg0: i32, %arg1: memref<64x784xf32, #tpu.memory_space<vmem>>, %arg2: memref<128x192xf32, #tpu.memory_space<vmem>>, %arg3: memref<128x2xf32, #tpu.memory_space<vmem>>, %arg4: memref<128x784xf32, #tpu.memory_space<vmem>>) attributes {dimension_semantics = [#tpu.dimension_semantics<arbitrary>], iteration_bounds = array<i64: 1>, scalar_prefetch = 0 : i64, scratch_operands = 0 : i64, tpu.core_type = #tpu.core_type<tc>, window_params = [{pipeline_mode = #tpu.pipeline_mode<synchronous>, transform_indices = @transform_0, window_bounds = array<i64: 64, 784>}, {pipeline_mode = #tpu.pipeline_mode<synchronous>, transform_indices = @transform_1, window_bounds = array<i64: 128, 192>}, {pipeline_mode = #tpu.pipeline_mode<synchronous>, transform_indices = @transform_2, window_bounds = array<i64: 128, 2>}, {pipeline_mode = #tpu.pipeline_mode<synchronous>, transform_indices = @transform_3, window_bounds = array<i64: 128, 784>}]} {
    %c0 = arith.constant 0 : index
    %c0_0 = arith.constant 0 : index
    %0 = vector.load %arg1[%c0, %c0_0] : memref<64x784xf32, #tpu.memory_space<vmem>>, vector<64x784xf32>
    %1 = tpu.iota {dimensions = array<i32: 1>} : vector<1x784xi32>
    %c28_i32 = arith.constant 28 : i32
    %c0_i32 = arith.constant 0 : i32
    %2 = arith.cmpi eq, %c28_i32, %c0_i32 : i32
    %c1_i32 = arith.constant 1 : i32
    %3 = arith.select %2, %c1_i32, %c28_i32 : i32
    %4 = vector.broadcast %3 : i32 to vector<1x784xi32>
    %5 = arith.remsi %1, %4 : vector<1x784xi32>
    %c0_i32_1 = arith.constant 0 : i32
    %6 = vector.broadcast %c0_i32_1 : i32 to vector<1x784xi32>
    %7 = arith.cmpi ne, %5, %6 : vector<1x784xi32>
    %c0_i32_2 = arith.constant 0 : i32
    %8 = vector.broadcast %c0_i32_2 : i32 to vector<1x784xi32>
    %9 = arith.cmpi slt, %5, %8 : vector<1x784xi32>
    %c0_i32_3 = arith.constant 0 : i32
    %10 = arith.cmpi slt, %3, %c0_i32_3 : i32
    %11 = vector.broadcast %10 : i1 to vector<1x784xi1>
    %12 = vector.broadcast %11 : vector<1x784xi1> to vector<1x784xi1>
    %13 = arith.xori %9, %12 : vector<1x784xi1>
    %14 = arith.andi %13, %7 : vector<1x784xi1>
    %15 = vector.broadcast %3 : i32 to vector<1x784xi32>
    %16 = arith.addi %5, %15 : vector<1x784xi32>
    %17 = arith.select %14, %16, %5 : vector<1x784xi1>, vector<1x784xi32>
    %c0_i32_4 = arith.constant 0 : i32
    %18 = vector.broadcast %c0_i32_4 : i32 to vector<1x784xi32>
    %19 = arith.cmpi eq, %17, %18 : vector<1x784xi32>
    %20 = vector.extract_strided_slice %0 {offsets = [0, 783], sizes = [64, 1], strides = [1, 1]} : vector<64x784xf32> to vector<64x1xf32>
    %21 = vector.extract_strided_slice %0 {offsets = [0, 0], sizes = [64, 783], strides = [1, 1]} : vector<64x784xf32> to vector<64x783xf32>
    %22 = tpu.concatenate %20, %21 in 1 : vector<64x1xf32>, vector<64x783xf32> -> vector<64x784xf32>
    %cst = arith.constant 0.000000e+00 : f32
    %23 = vector.shape_cast %19 : vector<1x784xi1> to vector<1x784xi1>
    %24 = vector.broadcast %23 : vector<1x784xi1> to vector<64x784xi1>
    %25 = vector.broadcast %cst : f32 to vector<64x784xf32>
    %26 = arith.select %24, %25, %22 : vector<64x784xi1>, vector<64x784xf32>
    %c27_i32 = arith.constant 27 : i32
    %27 = vector.broadcast %c27_i32 : i32 to vector<1x784xi32>
    %28 = arith.cmpi eq, %17, %27 : vector<1x784xi32>
    %29 = vector.extract_strided_slice %0 {offsets = [0, 1], sizes = [64, 783], strides = [1, 1]} : vector<64x784xf32> to vector<64x783xf32>
    %30 = vector.extract_strided_slice %0 {offsets = [0, 0], sizes = [64, 1], strides = [1, 1]} : vector<64x784xf32> to vector<64x1xf32>
    %31 = tpu.concatenate %29, %30 in 1 : vector<64x783xf32>, vector<64x1xf32> -> vector<64x784xf32>
    %cst_5 = arith.constant 0.000000e+00 : f32
    %32 = vector.shape_cast %28 : vector<1x784xi1> to vector<1x784xi1>
    %33 = vector.broadcast %32 : vector<1x784xi1> to vector<64x784xi1>
    %34 = vector.broadcast %cst_5 : f32 to vector<64x784xf32>
    %35 = arith.select %33, %34, %31 : vector<64x784xi1>, vector<64x784xf32>
    %36 = tpu.concatenate %26, %0, %35 in 0 : vector<64x784xf32>, vector<64x784xf32>, vector<64x784xf32> -> vector<192x784xf32>
    %c0_6 = arith.constant 0 : index
    %c0_7 = arith.constant 0 : index
    %37 = vector.load %arg2[%c0_6, %c0_7] : memref<128x192xf32, #tpu.memory_space<vmem>>, vector<128x192xf32>
    %cst_8 = arith.constant dense<0.000000e+00> : vector<128x784xf32>
    %38 = tpu.matmul %37, %36, %cst_8 {dimension_numbers = #tpu.dot_dimension_numbers<[1], [0], [0], [1], [0, 0, 1, 1], [], []>} : vector<128x192xf32>, vector<192x784xf32>, vector<128x784xf32> -> vector<128x784xf32>
    %c0_9 = arith.constant 0 : index
    %c0_10 = arith.constant 0 : index
    %39 = vector.load %arg3[%c0_9, %c0_10] : memref<128x2xf32, #tpu.memory_space<vmem>>, vector<128x1xf32>
    %40 = vector.extract_strided_slice %38 {offsets = [0, 756], sizes = [128, 28], strides = [1, 1]} : vector<128x784xf32> to vector<128x28xf32>
    %41 = vector.extract_strided_slice %38 {offsets = [0, 0], sizes = [128, 756], strides = [1, 1]} : vector<128x784xf32> to vector<128x756xf32>
    %42 = tpu.concatenate %40, %41 in 1 : vector<128x28xf32>, vector<128x756xf32> -> vector<128x784xf32>
    %43 = vector.broadcast %39 : vector<128x1xf32> to vector<128x784xf32>
    %44 = arith.mulf %43, %42 : vector<128x784xf32>
    %c0_11 = arith.constant 0 : index
    %c1 = arith.constant 1 : index
    %45 = vector.load %arg3[%c0_11, %c1] : memref<128x2xf32, #tpu.memory_space<vmem>>, vector<128x1xf32>
    %46 = vector.extract_strided_slice %38 {offsets = [0, 728], sizes = [128, 56], strides = [1, 1]} : vector<128x784xf32> to vector<128x56xf32>
    %47 = vector.extract_strided_slice %38 {offsets = [0, 0], sizes = [128, 728], strides = [1, 1]} : vector<128x784xf32> to vector<128x728xf32>
    %48 = tpu.concatenate %46, %47 in 1 : vector<128x56xf32>, vector<128x728xf32> -> vector<128x784xf32>
    %49 = vector.broadcast %45 : vector<128x1xf32> to vector<128x784xf32>
    %50 = arith.mulf %49, %48 : vector<128x784xf32>
    %51 = arith.addf %44, %50 : vector<128x784xf32>
    %c0_12 = arith.constant 0 : index
    %c0_13 = arith.constant 0 : index
    %52 = vector.load %arg4[%c0_12, %c0_13] : memref<128x784xf32, #tpu.memory_space<vmem>>, vector<128x784xf32>
    tpu.vector_store %arg4[%c0_12, %c0_13], %51 {strides = array<i32>} : memref<128x784xf32, #tpu.memory_space<vmem>>, vector<128x784xf32>,
    return
  }
  func.func @transform_0(%arg0: i32) -> (i32, i32) {
    %c0_i32 = arith.constant 0 : i32
    %c0_i32_0 = arith.constant 0 : i32
    %c0_i32_1 = arith.constant 0 : i32
    return %c0_i32, %c0_i32_0 : i32, i32
  }
  func.func @transform_1(%arg0: i32) -> (i32, i32) {
    %c0_i32 = arith.constant 0 : i32
    %c0_i32_0 = arith.constant 0 : i32
    %c0_i32_1 = arith.constant 0 : i32
    return %c0_i32, %c0_i32_0 : i32, i32
  }
  func.func @transform_2(%arg0: i32) -> (i32, i32) {
    %c0_i32 = arith.constant 0 : i32
    %c0_i32_0 = arith.constant 0 : i32
    %c0_i32_1 = arith.constant 0 : i32
    return %c0_i32, %c0_i32_0 : i32, i32
  }
  func.func @transform_3(%arg0: i32) -> (i32, i32) {
    %c0_i32 = arith.constant 0 : i32
    %c0_i32_0 = arith.constant 0 : i32
    %c0_i32_1 = arith.constant 0 : i32
    return %c0_i32, %c0_i32_0 : i32, i32
  }
}

</mosaic_0001>

<llo_original>
// kernel: kernel_generated_1_forward.1
$region0: #{kernel_generated_1_forward.1}
  #allocation0 [shape = 'u32[]', space=smem, size = 0x4, offset = 0x4, fixed_abs, tag = 'smem constant byte address 0x4 - core index']
  #allocation1 [shape = 'u32[144,128]{1,0:T(1,128)}', space=vmem, size = 0x12000, scoped, tag = 'internal scratch']
  %s0 = inlined_call_operand.vmem [shape: f32[64,784], index: 0, kind: input, shape index: {}]
  %s1 = inlined_call_operand.vmem [shape: f32[128,192], index: 1, kind: input, shape index: {}]
  %s2 = inlined_call_operand.vmem [shape: f32[128,2], index: 2, kind: input, shape index: {}]
  %s3 = inlined_call_operand.vmem [shape: f32[128,784], index: 3, kind: output, shape index: {}]
  %s4 = sld [smem:[#allocation0]]
  $region22: #{kernel_generated_1_forward.1} parent=0
    _
  %s6 = ssub.s32 1, %s4
  %s7 = scalar_select 0, %s6, %s4
  // Predicated region
  $region2: #{kernel_generated_1_forward.1} parent=0 // pred_check
    _
  $region3: #{kernel_generated_1_forward.1} parent=0 // pred_check_branch
    %9 = sbr.rel (0) target = $region5
  $region4: #{kernel_generated_1_forward.1} parent=0 // pred_region
    _
  $region5: #{kernel_generated_1_forward.1} parent=0 // pred_fallthru
    _
  // Predicated region
  $region6: #{kernel_generated_1_forward.1} parent=0 // pred_check
    _
  $region7: #{kernel_generated_1_forward.1} parent=0 // pred_check_branch
    %11 = sbr.rel (0) target = $region9
  $region8: #{kernel_generated_1_forward.1} parent=0 // pred_region
    _
  $region9: #{kernel_generated_1_forward.1} parent=0 // pred_fallthru
    _
  // Predicated region
  $region10: #{kernel_generated_1_forward.1} parent=0 // pred_check
    _
  $region11: #{kernel_generated_1_forward.1} parent=0 // pred_check_branch
    %13 = sbr.rel (0) target = $region13
  $region12: #{kernel_generated_1_forward.1} parent=0 // pred_region
    _
  $region13: #{kernel_generated_1_forward.1} parent=0 // pred_fallthru
    _
  %v14 = vld [vmem:[%s0] sm:$0xff]
  %v15 = vld [vmem:[%s0 + $0x8] sm:$0xff]
  %v16 = vld [vmem:[%s0 + $0x10] sm:$0xff]
  %v17 = vld [vmem:[%s0 + $0x18] sm:$0xff]
  %v18 = vld [vmem:[%s0 + $0x20] sm:$0xff]
  %v19 = vld [vmem:[%s0 + $0x28] sm:$0xff]
  %v20 = vld [vmem:[%s0 + $0x30] sm:$0xff]
  %v21 = vld [vmem:[%s0 + $0x38] sm:$0xff]
  %v22 = vld [vmem:[%s0 + $0x40] sm:$0xff]
  %v23 = vld [vmem:[%s0 + $0x48] sm:$0xff]
  %v24 = vld [vmem:[%s0 + $0x50] sm:$0xff]
  %v25 = vld [vmem:[%s0 + $0x58] sm:$0xff]
  %v26 = vld [vmem:[%s0 + $0x60] sm:$0xff]
  %v27 = vld [vmem:[%s0 + $0x68] sm:$0xff]
  %v28 = vld [vmem:[%s0 + $0x70] sm:$0xff]
  %v29 = vld [vmem:[%s0 + $0x78] sm:$0xff]
  %v30 = vld [vmem:[%s0 + $0x80] sm:$0xff]
  %v31 = vld [vmem:[%s0 + $0x88] sm:$0xff]
  %v32 = vld [vmem:[%s0 + $0x90] sm:$0xff]
  %v33 = vld [vmem:[%s0 + $0x98] sm:$0xff]
  %v34 = vld [vmem:[%s0 + $0xa0] sm:$0xff]
  %v35 = vld [vmem:[%s0 + $0xa8] sm:$0xff]
  %v36 = vld [vmem:[%s0 + $0xb0] sm:$0xff]
  %v37 = vld [vmem:[%s0 + $0xb8] sm:$0xff]
  %v38 = vld [vmem:[%s0 + $0xc0] sm:$0xff]
  %v39 = vld [vmem:[%s0 + $0xc8] sm:$0xff]
  %v40 = vld [vmem:[%s0 + $0xd0] sm:$0xff]
  %v41 = vld [vmem:[%s0 + $0xd8] sm:$0xff]
  %v42 = vld [vmem:[%s0 + $0xe0] sm:$0xff]
  %v43 = vld [vmem:[%s0 + $0xe8] sm:$0xff]
  %v44 = vld [vmem:[%s0 + $0xf0] sm:$0xff]
  %v45 = vld [vmem:[%s0 + $0xf8] sm:$0xff]
  %v46 = vld [vmem:[%s0 + $0x100] sm:$0xff]
  %v47 = vld [vmem:[%s0 + $0x108] sm:$0xff]
  %v48 = vld [vmem:[%s0 + $0x110] sm:$0xff]
  %v49 = vld [vmem:[%s0 + $0x118] sm:$0xff]
  %v50 = vld [vmem:[%s0 + $0x120] sm:$0xff]
  %v51 = vld [vmem:[%s0 + $0x128] sm:$0xff]
  %v52 = vld [vmem:[%s0 + $0x130] sm:$0xff]
  %v53 = vld [vmem:[%s0 + $0x138] sm:$0xff]
  %v54 = vld [vmem:[%s0 + $0x140] sm:$0xff]
  %v55 = vld [vmem:[%s0 + $0x148] sm:$0xff]
  %v56 = vld [vmem:[%s0 + $0x150] sm:$0xff]
  %v57 = vld [vmem:[%s0 + $0x158] sm:$0xff]
  %v58 = vld [vmem:[%s0 + $0x160] sm:$0xff]
  %v59 = vld [vmem:[%s0 + $0x168] sm:$0xff]
  %v60 = vld [vmem:[%s0 + $0x170] sm:$0xff]
  %v61 = vld [vmem:[%s0 + $0x178] sm:$0xff]
  %v62 = vld [vmem:[%s0 + $0x180] sm:$0xff]
  %v63 = vld [vmem:[%s0 + $0x188] sm:$0xff]
  %v64 = vld [vmem:[%s0 + $0x190] sm:$0xff]
  %v65 = vld [vmem:[%s0 + $0x198] sm:$0xff]
  %v66 = vld [vmem:[%s0 + $0x1a0] sm:$0xff]
  %v67 = vld [vmem:[%s0 + $0x1a8] sm:$0xff]
  %v68 = vld [vmem:[%s0 + $0x1b0] sm:$0xff]
  %v69 = vld [vmem:[%s0 + $0x1b8] sm:$0xff]
  %v70 = vlaneseq
  %v71 = vand.u32 %v70, 127
  %v72 = vadd.s32 %v71, 128
  %v73 = vadd.s32 %v71, 256
  %v74 = vadd.s32 %v71, 384
  %v75 = vadd.s32 %v71, 512
  %v76 = vadd.s32 %v71, 640
  %v77 = vadd.s32 %v71, 768
  %vm78 = vcmp.lt.s32.totalorder %v71, 0
  %v79 = vsub.s32 0, %v71
  %v80 = vsel %vm78, %v79, %v71
  %v81 = vmul.u32.u64.compose %v80, 2454267026
  %v82 = vextract.low.u32 %v81
  %v83 = vextract.high.u32 %v81
  %vm84 = vc.u32 %v82, 2454267026
  %v85 = vsel %vm84, 1, 0
  %v86 = vadd.s32 %v83, %v85
  %v87 = vshrl.u32 %v86, 4
  %v88 = vmul.u32 %v87, 28
  %v89 = vsub.s32 %v80, %v88
  %v90 = vsub.s32 0, %v89
  %v91 = vsel %vm78, %v90, %v89
  %vm92 = vcmp.lt.s32.totalorder %v72, 0
  %v93 = vsub.s32 0, %v72
  %v94 = vsel %vm92, %v93, %v72
  %v95 = vmul.u32.u64.compose %v94, 2454267026
  %v96 = vextract.low.u32 %v95
  %v97 = vextract.high.u32 %v95
  %vm98 = vc.u32 %v96, 2454267026
  %v99 = vsel %vm98, 1, 0
  %v100 = vadd.s32 %v97, %v99
  %v101 = vshrl.u32 %v100, 4
  %v102 = vmul.u32 %v101, 28
  %v103 = vsub.s32 %v94, %v102
  %v104 = vsub.s32 0, %v103
  %v105 = vsel %vm92, %v104, %v103
  %vm106 = vcmp.lt.s32.totalorder %v73, 0
  %v107 = vsub.s32 0, %v73
  %v108 = vsel %vm106, %v107, %v73
  %v109 = vmul.u32.u64.compose %v108, 2454267026
  %v110 = vextract.low.u32 %v109
  %v111 = vextract.high.u32 %v109
  %vm112 = vc.u32 %v110, 2454267026
  %v113 = vsel %vm112, 1, 0
  %v114 = vadd.s32 %v111, %v113
  %v115 = vshrl.u32 %v114, 4
  %v116 = vmul.u32 %v115, 28
  %v117 = vsub.s32 %v108, %v116
  %v118 = vsub.s32 0, %v117
  %v119 = vsel %vm106, %v118, %v117
  %vm120 = vcmp.lt.s32.totalorder %v74, 0
  %v121 = vsub.s32 0, %v74
  %v122 = vsel %vm120, %v121, %v74
  %v123 = vmul.u32.u64.compose %v122, 2454267026
  %v124 = vextract.low.u32 %v123
  %v125 = vextract.high.u32 %v123
  %vm126 = vc.u32 %v124, 2454267026
  %v127 = vsel %vm126, 1, 0
  %v128 = vadd.s32 %v125, %v127
  %v129 = vshrl.u32 %v128, 4
  %v130 = vmul.u32 %v129, 28
  %v131 = vsub.s32 %v122, %v130
  %v132 = vsub.s32 0, %v131
  %v133 = vsel %vm120, %v132, %v131
  %vm134 = vcmp.lt.s32.totalorder %v75, 0
  %v135 = vsub.s32 0, %v75
  %v136 = vsel %vm134, %v135, %v75
  %v137 = vmul.u32.u64.compose %v136, 2454267026
  %v138 = vextract.low.u32 %v137
  %v139 = vextract.high.u32 %v137
  %vm140 = vc.u32 %v138, 2454267026
  %v141 = vsel %vm140, 1, 0
  %v142 = vadd.s32 %v139, %v141
  %v143 = vshrl.u32 %v142, 4
  %v144 = vmul.u32 %v143, 28
  %v145 = vsub.s32 %v136, %v144
  %v146 = vsub.s32 0, %v145
  %v147 = vsel %vm134, %v146, %v145
  %vm148 = vcmp.lt.s32.totalorder %v76, 0
  %v149 = vsub.s32 0, %v76
  %v150 = vsel %vm148, %v149, %v76
  %v151 = vmul.u32.u64.compose %v150, 2454267026
  %v152 = vextract.low.u32 %v151
  %v153 = vextract.high.u32 %v151
  %vm154 = vc.u32 %v152, 2454267026
  %v155 = vsel %vm154, 1, 0
  %v156 = vadd.s32 %v153, %v155
  %v157 = vshrl.u32 %v156, 4
  %v158 = vmul.u32 %v157, 28
  %v159 = vsub.s32 %v150, %v158
  %v160 = vsub.s32 0, %v159
  %v161 = vsel %vm148, %v160, %v159
  %vm162 = vcmp.lt.s32.totalorder %v77, 0
  %v163 = vsub.s32 0, %v77
  %v164 = vsel %vm162, %v163, %v77
  %v165 = vmul.u32.u64.compose %v164, 2454267026
  %v166 = vextract.low.u32 %v165
  %v167 = vextract.high.u32 %v165
  %vm168 = vc.u32 %v166, 2454267026
  %v169 = vsel %vm168, 1, 0
  %v170 = vadd.s32 %v167, %v169
  %v171 = vshrl.u32 %v170, 4
  %v172 = vmul.u32 %v171, 28
  %v173 = vsub.s32 %v164, %v172
  %v174 = vsub.s32 0, %v173
  %v175 = vsel %vm162, %v174, %v173
  %vm176 = vcmp.ne.s32.totalorder %v91, 0
  %vm177 = vcmp.ne.s32.totalorder %v105, 0
  %vm178 = vcmp.ne.s32.totalorder %v119, 0
  %vm179 = vcmp.ne.s32.totalorder %v133, 0
  %vm180 = vcmp.ne.s32.totalorder %v147, 0
  %vm181 = vcmp.ne.s32.totalorder %v161, 0
  %vm182 = vcmp.ne.s32.totalorder %v175, 0
  %vm183 = vcmp.lt.s32.totalorder %v91, 0
  %vm184 = vcmp.lt.s32.totalorder %v105, 0
  %vm185 = vcmp.lt.s32.totalorder %v119, 0
  %vm186 = vcmp.lt.s32.totalorder %v133, 0
  %vm187 = vcmp.lt.s32.totalorder %v147, 0
  %vm188 = vcmp.lt.s32.totalorder %v161, 0
  %vm189 = vcmp.lt.s32.totalorder %v175, 0
  %vm190 = vmand %vm183, %vm176
  %vm191 = vmand %vm184, %vm177
  %vm192 = vmand %vm185, %vm178
  %vm193 = vmand %vm186, %vm179
  %vm194 = vmand %vm187, %vm180
  %vm195 = vmand %vm188, %vm181
  %vm196 = vmand %vm189, %vm182
  %v197 = vadd.s32 %v91, 28
  %v198 = vadd.s32 %v105, 28
  %v199 = vadd.s32 %v119, 28
  %v200 = vadd.s32 %v133, 28
  %v201 = vadd.s32 %v147, 28
  %v202 = vadd.s32 %v161, 28
  %v203 = vadd.s32 %v175, 28
  %v204 = vsel %vm190, %v197, %v91
  %v205 = vsel %vm191, %v198, %v105
  %v206 = vsel %vm192, %v199, %v119
  %v207 = vsel %vm193, %v200, %v133
  %v208 = vsel %vm194, %v201, %v147
  %v209 = vsel %vm195, %v202, %v161
  %v210 = vsel %vm196, %v203, %v175
  %vm211 = vcmp.eq.s32.totalorder %v204, 0
  %vm212 = vcmp.eq.s32.totalorder %v205, 0
  %vm213 = vcmp.eq.s32.totalorder %v206, 0
  %vm214 = vcmp.eq.s32.totalorder %v207, 0
  %vm215 = vcmp.eq.s32.totalorder %v208, 0
  %vm216 = vcmp.eq.s32.totalorder %v209, 0
  %vm217 = vcmp.eq.s32.totalorder %v210, 0
  %226 = vrot.lane.b32.xlu0 %v20, 113
  %v227 = vpop.permute.xlu0 %226
  %228 = vrot.lane.b32.xlu0 %v27, 113
  %v229 = vpop.permute.xlu0 %228
  %230 = vrot.lane.b32.xlu0 %v34, 113
  %v231 = vpop.permute.xlu0 %230
  %232 = vrot.lane.b32.xlu0 %v41, 113
  %v233 = vpop.permute.xlu0 %232
  %234 = vrot.lane.b32.xlu0 %v48, 113
  %v235 = vpop.permute.xlu0 %234
  %236 = vrot.lane.b32.xlu0 %v55, 113
  %v237 = vpop.permute.xlu0 %236
  %238 = vrot.lane.b32.xlu0 %v62, 113
  %v239 = vpop.permute.xlu0 %238
  %240 = vrot.lane.b32.xlu0 %v69, 113
  %v241 = vpop.permute.xlu0 %240
  %298 = vrot.lane.b32.xlu0 %v14, 1
  %v299 = vpop.permute.xlu0 %298
  %300 = vrot.lane.b32.xlu0 %v15, 1
  %v301 = vpop.permute.xlu0 %300
  %302 = vrot.lane.b32.xlu0 %v16, 1
  %v303 = vpop.permute.xlu0 %302
  %304 = vrot.lane.b32.xlu0 %v17, 1
  %v305 = vpop.permute.xlu0 %304
  %306 = vrot.lane.b32.xlu0 %v18, 1
  %v307 = vpop.permute.xlu0 %306
  %308 = vrot.lane.b32.xlu0 %v19, 1
  %v309 = vpop.permute.xlu0 %308
  %310 = vrot.lane.b32.xlu0 %v20, 1
  %v311 = vpop.permute.xlu0 %310
  %312 = vrot.lane.b32.xlu0 %v21, 1
  %v313 = vpop.permute.xlu0 %312
  %314 = vrot.lane.b32.xlu0 %v22, 1
  %v315 = vpop.permute.xlu0 %314
  %316 = vrot.lane.b32.xlu0 %v23, 1
  %v317 = vpop.permute.xlu0 %316
  %318 = vrot.lane.b32.xlu0 %v24, 1
  %v319 = vpop.permute.xlu0 %318
  %320 = vrot.lane.b32.xlu0 %v25, 1
  %v321 = vpop.permute.xlu0 %320
  %322 = vrot.lane.b32.xlu0 %v26, 1
  %v323 = vpop.permute.xlu0 %322
  %324 = vrot.lane.b32.xlu0 %v27, 1
  %v325 = vpop.permute.xlu0 %324
  %326 = vrot.lane.b32.xlu0 %v28, 1
  %v327 = vpop.permute.xlu0 %326
  %328 = vrot.lane.b32.xlu0 %v29, 1
  %v329 = vpop.permute.xlu0 %328
  %330 = vrot.lane.b32.xlu0 %v30, 1
  %v331 = vpop.permute.xlu0 %330
  %332 = vrot.lane.b32.xlu0 %v31, 1
  %v333 = vpop.permute.xlu0 %332
  %334 = vrot.lane.b32.xlu0 %v32, 1
  %v335 = vpop.permute.xlu0 %334
  %336 = vrot.lane.b32.xlu0 %v33, 1
  %v337 = vpop.permute.xlu0 %336
  %338 = vrot.lane.b32.xlu0 %v34, 1
  %v339 = vpop.permute.xlu0 %338
  %340 = vrot.lane.b32.xlu0 %v35, 1
  %v341 = vpop.permute.xlu0 %340
  %342 = vrot.lane.b32.xlu0 %v36, 1
  %v343 = vpop.permute.xlu0 %342
  %344 = vrot.lane.b32.xlu0 %v37, 1
  %v345 = vpop.permute.xlu0 %344
  %346 = vrot.lane.b32.xlu0 %v38, 1
  %v347 = vpop.permute.xlu0 %346
  %348 = vrot.lane.b32.xlu0 %v39, 1
  %v349 = vpop.permute.xlu0 %348
  %350 = vrot.lane.b32.xlu0 %v40, 1
  %v351 = vpop.permute.xlu0 %350
  %352 = vrot.lane.b32.xlu0 %v41, 1
  %v353 = vpop.permute.xlu0 %352
  %354 = vrot.lane.b32.xlu0 %v42, 1
  %v355 = vpop.permute.xlu0 %354
  %356 = vrot.lane.b32.xlu0 %v43, 1
  %v357 = vpop.permute.xlu0 %356
  %358 = vrot.lane.b32.xlu0 %v44, 1
  %v359 = vpop.permute.xlu0 %358
  %360 = vrot.lane.b32.xlu0 %v45, 1
  %v361 = vpop.permute.xlu0 %360
  %362 = vrot.lane.b32.xlu0 %v46, 1
  %v363 = vpop.permute.xlu0 %362
  %364 = vrot.lane.b32.xlu0 %v47, 1
  %v365 = vpop.permute.xlu0 %364
  %366 = vrot.lane.b32.xlu0 %v48, 1
  %v367 = vpop.permute.xlu0 %366
  %368 = vrot.lane.b32.xlu0 %v49, 1
  %v369 = vpop.permute.xlu0 %368
  %370 = vrot.lane.b32.xlu0 %v50, 1
  %v371 = vpop.permute.xlu0 %370
  %372 = vrot.lane.b32.xlu0 %v51, 1
  %v373 = vpop.permute.xlu0 %372
  %374 = vrot.lane.b32.xlu0 %v52, 1
  %v375 = vpop.permute.xlu0 %374
  %376 = vrot.lane.b32.xlu0 %v53, 1
  %v377 = vpop.permute.xlu0 %376
  %378 = vrot.lane.b32.xlu0 %v54, 1
  %v379 = vpop.permute.xlu0 %378
  %380 = vrot.lane.b32.xlu0 %v55, 1
  %v381 = vpop.permute.xlu0 %380
  %382 = vrot.lane.b32.xlu0 %v56, 1
  %v383 = vpop.permute.xlu0 %382
  %384 = vrot.lane.b32.xlu0 %v57, 1
  %v385 = vpop.permute.xlu0 %384
  %386 = vrot.lane.b32.xlu0 %v58, 1
  %v387 = vpop.permute.xlu0 %386
  %388 = vrot.lane.b32.xlu0 %v59, 1
  %v389 = vpop.permute.xlu0 %388
  %390 = vrot.lane.b32.xlu0 %v60, 1
  %v391 = vpop.permute.xlu0 %390
  %392 = vrot.lane.b32.xlu0 %v61, 1
  %v393 = vpop.permute.xlu0 %392
  %394 = vrot.lane.b32.xlu0 %v62, 1
  %v395 = vpop.permute.xlu0 %394
  %396 = vrot.lane.b32.xlu0 %v63, 1
  %v397 = vpop.permute.xlu0 %396
  %398 = vrot.lane.b32.xlu0 %v64, 1
  %v399 = vpop.permute.xlu0 %398
  %400 = vrot.lane.b32.xlu0 %v65, 1
  %v401 = vpop.permute.xlu0 %400
  %402 = vrot.lane.b32.xlu0 %v66, 1
  %v403 = vpop.permute.xlu0 %402
  %404 = vrot.lane.b32.xlu0 %v67, 1
  %v405 = vpop.permute.xlu0 %404
  %406 = vrot.lane.b32.xlu0 %v68, 1
  %v407 = vpop.permute.xlu0 %406
  %408 = vrot.lane.b32.xlu0 %v69, 1
  %v409 = vpop.permute.xlu0 %408
  %vm410 = vcmask 7168
  %v411 = vsel %vm410, %v299, %v301
  %v412 = vsel %vm410, %v301, %v303
  %v413 = vsel %vm410, %v303, %v305
  %v414 = vsel %vm410, %v305, %v307
  %v415 = vsel %vm410, %v307, %v309
  %v416 = vsel %vm410, %v309, %v311
  %v417 = vsel %vm410, %v313, %v315
  %v418 = vsel %vm410, %v315, %v317
  %v419 = vsel %vm410, %v317, %v319
  %v420 = vsel %vm410, %v319, %v321
  %v421 = vsel %vm410, %v321, %v323
  %v422 = vsel %vm410, %v323, %v325
  %v423 = vsel %vm410, %v327, %v329
  %v424 = vsel %vm410, %v329, %v331
  %v425 = vsel %vm410, %v331, %v333
  %v426 = vsel %vm410, %v333, %v335
  %v427 = vsel %vm410, %v335, %v337
  %v428 = vsel %vm410, %v337, %v339
  %v429 = vsel %vm410, %v341, %v343
  %v430 = vsel %vm410, %v343, %v345
  %v431 = vsel %vm410, %v345, %v347
  %v432 = vsel %vm410, %v347, %v349
  %v433 = vsel %vm410, %v349, %v351
  %v434 = vsel %vm410, %v351, %v353
  %v435 = vsel %vm410, %v355, %v357
  %v436 = vsel %vm410, %v357, %v359
  %v437 = vsel %vm410, %v359, %v361
  %v438 = vsel %vm410, %v361, %v363
  %v439 = vsel %vm410, %v363, %v365
  %v440 = vsel %vm410, %v365, %v367
  %v441 = vsel %vm410, %v369, %v371
  %v442 = vsel %vm410, %v371, %v373
  %v443 = vsel %vm410, %v373, %v375
  %v444 = vsel %vm410, %v375, %v377
  %v445 = vsel %vm410, %v377, %v379
  %v446 = vsel %vm410, %v379, %v381
  %v447 = vsel %vm410, %v383, %v385
  %v448 = vsel %vm410, %v385, %v387
  %v449 = vsel %vm410, %v387, %v389
  %v450 = vsel %vm410, %v389, %v391
  %v451 = vsel %vm410, %v391, %v393
  %v452 = vsel %vm410, %v393, %v395
  %v453 = vsel %vm410, %v397, %v399
  %v454 = vsel %vm410, %v399, %v401
  %v455 = vsel %vm410, %v401, %v403
  %v456 = vsel %vm410, %v403, %v405
  %v457 = vsel %vm410, %v405, %v407
  %v458 = vsel %vm410, %v407, %v409
  %v515 = vsel %vm410, %v227, %v299
  %v516 = vsel %vm410, %v229, %v313
  %v517 = vsel %vm410, %v231, %v327
  %v518 = vsel %vm410, %v233, %v341
  %v519 = vsel %vm410, %v235, %v355
  %v520 = vsel %vm410, %v237, %v369
  %v521 = vsel %vm410, %v239, %v383
  %v522 = vsel %vm410, %v241, %v397
  %v523 = vsel %vm211, 1, 0
  %v524 = vsel %vm212, 1, 0
  %v525 = vsel %vm213, 1, 0
  %v526 = vsel %vm214, 1, 0
  %v527 = vsel %vm215, 1, 0
  %v528 = vsel %vm216, 1, 0
  %v529 = vsel %vm217, 1, 0
  %vm530 = vcmp.eq.s32.totalorder %v523, 1
  %vm531 = vcmp.eq.s32.totalorder %v524, 1
  %vm532 = vcmp.eq.s32.totalorder %v525, 1
  %vm533 = vcmp.eq.s32.totalorder %v526, 1
  %vm534 = vcmp.eq.s32.totalorder %v527, 1
  %vm535 = vcmp.eq.s32.totalorder %v528, 1
  %vm536 = vcmp.eq.s32.totalorder %v529, 1
  %v537 = vsel %vm530, 0.0, %v515
  %v538 = vsel %vm531, 0.0, %v411
  %v539 = vsel %vm532, 0.0, %v412
  %v540 = vsel %vm533, 0.0, %v413
  %v541 = vsel %vm534, 0.0, %v414
  %v542 = vsel %vm535, 0.0, %v415
  %v543 = vsel %vm536, 0.0, %v416
  %v544 = vsel %vm530, 0.0, %v516
  %v545 = vsel %vm531, 0.0, %v417
  %v546 = vsel %vm532, 0.0, %v418
  %v547 = vsel %vm533, 0.0, %v419
  %v548 = vsel %vm534, 0.0, %v420
  %v549 = vsel %vm535, 0.0, %v421
  %v550 = vsel %vm536, 0.0, %v422
  %v551 = vsel %vm530, 0.0, %v517
  %v552 = vsel %vm531, 0.0, %v423
  %v553 = vsel %vm532, 0.0, %v424
  %v554 = vsel %vm533, 0.0, %v425
  %v555 = vsel %vm534, 0.0, %v426
  %v556 = vsel %vm535, 0.0, %v427
  %v557 = vsel %vm536, 0.0, %v428
  %v558 = vsel %vm530, 0.0, %v518
  %v559 = vsel %vm531, 0.0, %v429
  %v560 = vsel %vm532, 0.0, %v430
  %v561 = vsel %vm533, 0.0, %v431
  %v562 = vsel %vm534, 0.0, %v432
  %v563 = vsel %vm535, 0.0, %v433
  %v564 = vsel %vm536, 0.0, %v434
  %v565 = vsel %vm530, 0.0, %v519
  %v566 = vsel %vm531, 0.0, %v435
  %v567 = vsel %vm532, 0.0, %v436
  %v568 = vsel %vm533, 0.0, %v437
  %v569 = vsel %vm534, 0.0, %v438
  %v570 = vsel %vm535, 0.0, %v439
  %v571 = vsel %vm536, 0.0, %v440
  %v572 = vsel %vm530, 0.0, %v520
  %v573 = vsel %vm531, 0.0, %v441
  %v574 = vsel %vm532, 0.0, %v442
  %v575 = vsel %vm533, 0.0, %v443
  %v576 = vsel %vm534, 0.0, %v444
  %v577 = vsel %vm535, 0.0, %v445
  %v578 = vsel %vm536, 0.0, %v446
  %v579 = vsel %vm530, 0.0, %v521
  %v580 = vsel %vm531, 0.0, %v447
  %v581 = vsel %vm532, 0.0, %v448
  %v582 = vsel %vm533, 0.0, %v449
  %v583 = vsel %vm534, 0.0, %v450
  %v584 = vsel %vm535, 0.0, %v451
  %v585 = vsel %vm536, 0.0, %v452
  %v586 = vsel %vm530, 0.0, %v522
  %v587 = vsel %vm531, 0.0, %v453
  %v588 = vsel %vm532, 0.0, %v454
  %v589 = vsel %vm533, 0.0, %v455
  %v590 = vsel %vm534, 0.0, %v456
  %v591 = vsel %vm535, 0.0, %v457
  %v592 = vsel %vm536, 0.0, %v458
  %vm593 = vcmp.eq.s32.totalorder %v204, 27
  %vm594 = vcmp.eq.s32.totalorder %v205, 27
  %vm595 = vcmp.eq.s32.totalorder %v206, 27
  %vm596 = vcmp.eq.s32.totalorder %v207, 27
  %vm597 = vcmp.eq.s32.totalorder %v208, 27
  %vm598 = vcmp.eq.s32.totalorder %v209, 27
  %vm599 = vcmp.eq.s32.totalorder %v210, 27
  %600 = vrot.lane.b32.xlu0 %v14, 127
  %v601 = vpop.permute.xlu0 %600
  %602 = vrot.lane.b32.xlu0 %v15, 127
  %v603 = vpop.permute.xlu0 %602
  %604 = vrot.lane.b32.xlu0 %v16, 127
  %v605 = vpop.permute.xlu0 %604
  %606 = vrot.lane.b32.xlu0 %v17, 127
  %v607 = vpop.permute.xlu0 %606
  %608 = vrot.lane.b32.xlu0 %v18, 127
  %v609 = vpop.permute.xlu0 %608
  %610 = vrot.lane.b32.xlu0 %v19, 127
  %v611 = vpop.permute.xlu0 %610
  %612 = vrot.lane.b32.xlu0 %v20, 127
  %v613 = vpop.permute.xlu0 %612
  %614 = vrot.lane.b32.xlu0 %v21, 127
  %v615 = vpop.permute.xlu0 %614
  %616 = vrot.lane.b32.xlu0 %v22, 127
  %v617 = vpop.permute.xlu0 %616
  %618 = vrot.lane.b32.xlu0 %v23, 127
  %v619 = vpop.permute.xlu0 %618
  %620 = vrot.lane.b32.xlu0 %v24, 127
  %v621 = vpop.permute.xlu0 %620
  %622 = vrot.lane.b32.xlu0 %v25, 127
  %v623 = vpop.permute.xlu0 %622
  %624 = vrot.lane.b32.xlu0 %v26, 127
  %v625 = vpop.permute.xlu0 %624
  %626 = vrot.lane.b32.xlu0 %v27, 127
  %v627 = vpop.permute.xlu0 %626
  %628 = vrot.lane.b32.xlu0 %v28, 127
  %v629 = vpop.permute.xlu0 %628
  %630 = vrot.lane.b32.xlu0 %v29, 127
  %v631 = vpop.permute.xlu0 %630
  %632 = vrot.lane.b32.xlu0 %v30, 127
  %v633 = vpop.permute.xlu0 %632
  %634 = vrot.lane.b32.xlu0 %v31, 127
  %v635 = vpop.permute.xlu0 %634
  %636 = vrot.lane.b32.xlu0 %v32, 127
  %v637 = vpop.permute.xlu0 %636
  %638 = vrot.lane.b32.xlu0 %v33, 127
  %v639 = vpop.permute.xlu0 %638
  %640 = vrot.lane.b32.xlu0 %v34, 127
  %v641 = vpop.permute.xlu0 %640
  %642 = vrot.lane.b32.xlu0 %v35, 127
  %v643 = vpop.permute.xlu0 %642
  %644 = vrot.lane.b32.xlu0 %v36, 127
  %v645 = vpop.permute.xlu0 %644
  %646 = vrot.lane.b32.xlu0 %v37, 127
  %v647 = vpop.permute.xlu0 %646
  %648 = vrot.lane.b32.xlu0 %v38, 127
  %v649 = vpop.permute.xlu0 %648
  %650 = vrot.lane.b32.xlu0 %v39, 127
  %v651 = vpop.permute.xlu0 %650
  %652 = vrot.lane.b32.xlu0 %v40, 127
  %v653 = vpop.permute.xlu0 %652
  %654 = vrot.lane.b32.xlu0 %v41, 127
  %v655 = vpop.permute.xlu0 %654
  %656 = vrot.lane.b32.xlu0 %v42, 127
  %v657 = vpop.permute.xlu0 %656
  %658 = vrot.lane.b32.xlu0 %v43, 127
  %v659 = vpop.permute.xlu0 %658
  %660 = vrot.lane.b32.xlu0 %v44, 127
  %v661 = vpop.permute.xlu0 %660
  %662 = vrot.lane.b32.xlu0 %v45, 127
  %v663 = vpop.permute.xlu0 %662
  %664 = vrot.lane.b32.xlu0 %v46, 127
  %v665 = vpop.permute.xlu0 %664
  %666 = vrot.lane.b32.xlu0 %v47, 127
  %v667 = vpop.permute.xlu0 %666
  %668 = vrot.lane.b32.xlu0 %v48, 127
  %v669 = vpop.permute.xlu0 %668
  %670 = vrot.lane.b32.xlu0 %v49, 127
  %v671 = vpop.permute.xlu0 %670
  %672 = vrot.lane.b32.xlu0 %v50, 127
  %v673 = vpop.permute.xlu0 %672
  %674 = vrot.lane.b32.xlu0 %v51, 127
  %v675 = vpop.permute.xlu0 %674
  %676 = vrot.lane.b32.xlu0 %v52, 127
  %v677 = vpop.permute.xlu0 %676
  %678 = vrot.lane.b32.xlu0 %v53, 127
  %v679 = vpop.permute.xlu0 %678
  %680 = vrot.lane.b32.xlu0 %v54, 127
  %v681 = vpop.permute.xlu0 %680
  %682 = vrot.lane.b32.xlu0 %v55, 127
  %v683 = vpop.permute.xlu0 %682
  %684 = vrot.lane.b32.xlu0 %v56, 127
  %v685 = vpop.permute.xlu0 %684
  %686 = vrot.lane.b32.xlu0 %v57, 127
  %v687 = vpop.permute.xlu0 %686
  %688 = vrot.lane.b32.xlu0 %v58, 127
  %v689 = vpop.permute.xlu0 %688
  %690 = vrot.lane.b32.xlu0 %v59, 127
  %v691 = vpop.permute.xlu0 %690
  %692 = vrot.lane.b32.xlu0 %v60, 127
  %v693 = vpop.permute.xlu0 %692
  %694 = vrot.lane.b32.xlu0 %v61, 127
  %v695 = vpop.permute.xlu0 %694
  %696 = vrot.lane.b32.xlu0 %v62, 127
  %v697 = vpop.permute.xlu0 %696
  %698 = vrot.lane.b32.xlu0 %v63, 127
  %v699 = vpop.permute.xlu0 %698
  %700 = vrot.lane.b32.xlu0 %v64, 127
  %v701 = vpop.permute.xlu0 %700
  %702 = vrot.lane.b32.xlu0 %v65, 127
  %v703 = vpop.permute.xlu0 %702
  %704 = vrot.lane.b32.xlu0 %v66, 127
  %v705 = vpop.permute.xlu0 %704
  %706 = vrot.lane.b32.xlu0 %v67, 127
  %v707 = vpop.permute.xlu0 %706
  %708 = vrot.lane.b32.xlu0 %v68, 127
  %v709 = vpop.permute.xlu0 %708
  %710 = vrot.lane.b32.xlu0 %v69, 127
  %v711 = vpop.permute.xlu0 %710
  %vm712 = vcmask 1039360
  %v713 = vsel %vm712, %v601, %v603
  %v714 = vsel %vm712, %v603, %v605
  %v715 = vsel %vm712, %v605, %v607
  %v716 = vsel %vm712, %v607, %v609
  %v717 = vsel %vm712, %v609, %v611
  %v718 = vsel %vm712, %v611, %v613
  %v719 = vsel %vm712, %v615, %v617
  %v720 = vsel %vm712, %v617, %v619
  %v721 = vsel %vm712, %v619, %v621
  %v722 = vsel %vm712, %v621, %v623
  %v723 = vsel %vm712, %v623, %v625
  %v724 = vsel %vm712, %v625, %v627
  %v725 = vsel %vm712, %v629, %v631
  %v726 = vsel %vm712, %v631, %v633
  %v727 = vsel %vm712, %v633, %v635
  %v728 = vsel %vm712, %v635, %v637
  %v729 = vsel %vm712, %v637, %v639
  %v730 = vsel %vm712, %v639, %v641
  %v731 = vsel %vm712, %v643, %v645
  %v732 = vsel %vm712, %v645, %v647
  %v733 = vsel %vm712, %v647, %v649
  %v734 = vsel %vm712, %v649, %v651
  %v735 = vsel %vm712, %v651, %v653
  %v736 = vsel %vm712, %v653, %v655
  %v737 = vsel %vm712, %v657, %v659
  %v738 = vsel %vm712, %v659, %v661
  %v739 = vsel %vm712, %v661, %v663
  %v740 = vsel %vm712, %v663, %v665
  %v741 = vsel %vm712, %v665, %v667
  %v742 = vsel %vm712, %v667, %v669
  %v743 = vsel %vm712, %v671, %v673
  %v744 = vsel %vm712, %v673, %v675
  %v745 = vsel %vm712, %v675, %v677
  %v746 = vsel %vm712, %v677, %v679
  %v747 = vsel %vm712, %v679, %v681
  %v748 = vsel %vm712, %v681, %v683
  %v749 = vsel %vm712, %v685, %v687
  %v750 = vsel %vm712, %v687, %v689
  %v751 = vsel %vm712, %v689, %v691
  %v752 = vsel %vm712, %v691, %v693
  %v753 = vsel %vm712, %v693, %v695
  %v754 = vsel %vm712, %v695, %v697
  %v755 = vsel %vm712, %v699, %v701
  %v756 = vsel %vm712, %v701, %v703
  %v757 = vsel %vm712, %v703, %v705
  %v758 = vsel %vm712, %v705, %v707
  %v759 = vsel %vm712, %v707, %v709
  %v760 = vsel %vm712, %v709, %v711
  %817 = vrot.lane.b32.xlu0 %v14, 15
  %v818 = vpop.permute.xlu0 %817
  %819 = vrot.lane.b32.xlu0 %v21, 15
  %v820 = vpop.permute.xlu0 %819
  %821 = vrot.lane.b32.xlu0 %v28, 15
  %v822 = vpop.permute.xlu0 %821
  %823 = vrot.lane.b32.xlu0 %v35, 15
  %v824 = vpop.permute.xlu0 %823
  %825 = vrot.lane.b32.xlu0 %v42, 15
  %v826 = vpop.permute.xlu0 %825
  %827 = vrot.lane.b32.xlu0 %v49, 15
  %v828 = vpop.permute.xlu0 %827
  %829 = vrot.lane.b32.xlu0 %v56, 15
  %v830 = vpop.permute.xlu0 %829
  %831 = vrot.lane.b32.xlu0 %v63, 15
  %v832 = vpop.permute.xlu0 %831
  %vm841 = vcmask 121856
  %v842 = vsel %vm841, %v613, %v818
  %v843 = vsel %vm841, %v627, %v820
  %v844 = vsel %vm841, %v641, %v822
  %v845 = vsel %vm841, %v655, %v824
  %v846 = vsel %vm841, %v669, %v826
  %v847 = vsel %vm841, %v683, %v828
  %v848 = vsel %vm841, %v697, %v830
  %v849 = vsel %vm841, %v711, %v832
  %v850 = vsel %vm593, 1, 0
  %v851 = vsel %vm594, 1, 0
  %v852 = vsel %vm595, 1, 0
  %v853 = vsel %vm596, 1, 0
  %v854 = vsel %vm597, 1, 0
  %v855 = vsel %vm598, 1, 0
  %v856 = vsel %vm599, 1, 0
  %vm857 = vcmp.eq.s32.totalorder %v850, 1
  %vm858 = vcmp.eq.s32.totalorder %v851, 1
  %vm859 = vcmp.eq.s32.totalorder %v852, 1
  %vm860 = vcmp.eq.s32.totalorder %v853, 1
  %vm861 = vcmp.eq.s32.totalorder %v854, 1
  %vm862 = vcmp.eq.s32.totalorder %v855, 1
  %vm863 = vcmp.eq.s32.totalorder %v856, 1
  %v864 = vsel %vm857, 0.0, %v713
  %v865 = vsel %vm858, 0.0, %v714
  %v866 = vsel %vm859, 0.0, %v715
  %v867 = vsel %vm860, 0.0, %v716
  %v868 = vsel %vm861, 0.0, %v717
  %v869 = vsel %vm862, 0.0, %v718
  %v870 = vsel %vm863, 0.0, %v842
  %v871 = vsel %vm857, 0.0, %v719
  %v872 = vsel %vm858, 0.0, %v720
  %v873 = vsel %vm859, 0.0, %v721
  %v874 = vsel %vm860, 0.0, %v722
  %v875 = vsel %vm861, 0.0, %v723
  %v876 = vsel %vm862, 0.0, %v724
  %v877 = vsel %vm863, 0.0, %v843
  %v878 = vsel %vm857, 0.0, %v725
  %v879 = vsel %vm858, 0.0, %v726
  %v880 = vsel %vm859, 0.0, %v727
  %v881 = vsel %vm860, 0.0, %v728
  %v882 = vsel %vm861, 0.0, %v729
  %v883 = vsel %vm862, 0.0, %v730
  %v884 = vsel %vm863, 0.0, %v844
  %v885 = vsel %vm857, 0.0, %v731
  %v886 = vsel %vm858, 0.0, %v732
  %v887 = vsel %vm859, 0.0, %v733
  %v888 = vsel %vm860, 0.0, %v734
  %v889 = vsel %vm861, 0.0, %v735
  %v890 = vsel %vm862, 0.0, %v736
  %v891 = vsel %vm863, 0.0, %v845
  %v892 = vsel %vm857, 0.0, %v737
  %v893 = vsel %vm858, 0.0, %v738
  %v894 = vsel %vm859, 0.0, %v739
  %v895 = vsel %vm860, 0.0, %v740
  %v896 = vsel %vm861, 0.0, %v741
  %v897 = vsel %vm862, 0.0, %v742
  %v898 = vsel %vm863, 0.0, %v846
  %v899 = vsel %vm857, 0.0, %v743
  %v900 = vsel %vm858, 0.0, %v744
  %v901 = vsel %vm859, 0.0, %v745
  %v902 = vsel %vm860, 0.0, %v746
  %v903 = vsel %vm861, 0.0, %v747
  %v904 = vsel %vm862, 0.0, %v748
  %v905 = vsel %vm863, 0.0, %v847
  %v906 = vsel %vm857, 0.0, %v749
  %v907 = vsel %vm858, 0.0, %v750
  %v908 = vsel %vm859, 0.0, %v751
  %v909 = vsel %vm860, 0.0, %v752
  %v910 = vsel %vm861, 0.0, %v753
  %v911 = vsel %vm862, 0.0, %v754
  %v912 = vsel %vm863, 0.0, %v848
  %v913 = vsel %vm857, 0.0, %v755
  %v914 = vsel %vm858, 0.0, %v756
  %v915 = vsel %vm859, 0.0, %v757
  %v916 = vsel %vm860, 0.0, %v758
  %v917 = vsel %vm861, 0.0, %v759
  %v918 = vsel %vm862, 0.0, %v760
  %v919 = vsel %vm863, 0.0, %v849
  %v920 = vld [vmem:[%s1] sm:$0xff]
  %v921 = vld [vmem:[%s1 + $0x8] sm:$0xff]
  %v922 = vld [vmem:[%s1 + $0x10] sm:$0xff]
  %v923 = vld [vmem:[%s1 + $0x18] sm:$0xff]
  %v924 = vld [vmem:[%s1 + $0x20] sm:$0xff]
  %v925 = vld [vmem:[%s1 + $0x28] sm:$0xff]
  %v926 = vld [vmem:[%s1 + $0x30] sm:$0xff]
  %v927 = vld [vmem:[%s1 + $0x38] sm:$0xff]
  %v928 = vld [vmem:[%s1 + $0x40] sm:$0xff]
  %v929 = vld [vmem:[%s1 + $0x48] sm:$0xff]
  %v930 = vld [vmem:[%s1 + $0x50] sm:$0xff]
  %v931 = vld [vmem:[%s1 + $0x58] sm:$0xff]
  %v932 = vld [vmem:[%s1 + $0x60] sm:$0xff]
  %v933 = vld [vmem:[%s1 + $0x68] sm:$0xff]
  %v934 = vld [vmem:[%s1 + $0x70] sm:$0xff]
  %v935 = vld [vmem:[%s1 + $0x78] sm:$0xff]
  %v936 = vld [vmem:[%s1 + $0x80] sm:$0xff]
  %v937 = vld [vmem:[%s1 + $0x88] sm:$0xff]
  %v938 = vld [vmem:[%s1 + $0x90] sm:$0xff]
  %v939 = vld [vmem:[%s1 + $0x98] sm:$0xff]
  %v940 = vld [vmem:[%s1 + $0xa0] sm:$0xff]
  %v941 = vld [vmem:[%s1 + $0xa8] sm:$0xff]
  %v942 = vld [vmem:[%s1 + $0xb0] sm:$0xff]
  %v943 = vld [vmem:[%s1 + $0xb8] sm:$0xff]
  %v944 = vld [vmem:[%s1 + $0xc0] sm:$0xff]
  %v945 = vld [vmem:[%s1 + $0xc8] sm:$0xff]
  %v946 = vld [vmem:[%s1 + $0xd0] sm:$0xff]
  %v947 = vld [vmem:[%s1 + $0xd8] sm:$0xff]
  %v948 = vld [vmem:[%s1 + $0xe0] sm:$0xff]
  %v949 = vld [vmem:[%s1 + $0xe8] sm:$0xff]
  %v950 = vld [vmem:[%s1 + $0xf0] sm:$0xff]
  %v951 = vld [vmem:[%s1 + $0xf8] sm:$0xff]
  %vm952 = vcmask 523264
  %v954 = vsel %vm952, %v921, 0
  %v957 = vsel %vm952, %v923, 0
  %v960 = vsel %vm952, %v925, 0
  %v963 = vsel %vm952, %v927, 0
  %v966 = vsel %vm952, %v929, 0
  %v969 = vsel %vm952, %v931, 0
  %v972 = vsel %vm952, %v933, 0
  %v975 = vsel %vm952, %v935, 0
  %v978 = vsel %vm952, %v937, 0
  %v981 = vsel %vm952, %v939, 0
  %v984 = vsel %vm952, %v941, 0
  %v987 = vsel %vm952, %v943, 0
  %v990 = vsel %vm952, %v945, 0
  %v993 = vsel %vm952, %v947, 0
  %v996 = vsel %vm952, %v949, 0
  %v999 = vsel %vm952, %v951, 0
  %1001 = vmatprep.subr.mxu0 %v538
  %1002 = vmatpush1.msra.mxu0 %v537
  %1003 = vmatprep.subr.mxu0 %v545
  %1004 = vmatpush1.msra.mxu0 %v544
  %1005 = vmatprep.subr.mxu0 %v552
  %1006 = vmatpush1.msra.mxu0 %v551
  %1007 = vmatprep.subr.mxu0 %v559
  %1008 = vmatpush1.msra.mxu0 %v558
  %1009 = vmatprep.subr.mxu0 %v566
  %1010 = vmatpush1.msra.mxu0 %v565
  %1011 = vmatprep.subr.mxu0 %v573
  %1012 = vmatpush1.msra.mxu0 %v572
  %1013 = vmatprep.subr.mxu0 %v580
  %1014 = vmatpush1.msra.mxu0 %v579
  %1015 = vmatprep.subr.mxu0 %v587
  %1016 = vmatpush1.msra.mxu0 %v586
  %1017 = vmatprep.subr.mxu0 %v15
  %1018 = vmatpush1.msra.mxu0 %v14
  %1019 = vmatprep.subr.mxu0 %v22
  %1020 = vmatpush1.msra.mxu0 %v21
  %1021 = vmatprep.subr.mxu0 %v29
  %1022 = vmatpush1.msra.mxu0 %v28
  %1023 = vmatprep.subr.mxu0 %v36
  %1024 = vmatpush1.msra.mxu0 %v35
  %1025 = vmatprep.subr.mxu0 %v43
  %1026 = vmatpush1.msra.mxu0 %v42
  %1027 = vmatprep.subr.mxu0 %v50
  %1028 = vmatpush1.msra.mxu0 %v49
  %1029 = vmatprep.subr.mxu0 %v57
  %1030 = vmatpush1.msra.mxu0 %v56
  %1031 = vmatprep.subr.mxu0 %v64
  %1032 = vmatpush1.msra.mxu0 %v63
  %1033 = vmatprep.subr.mxu0 %v865
  %1034 = vmatpush1.msra.mxu0 %v864
  %1035 = vmatprep.subr.mxu0 %v872
  %1036 = vmatpush1.msra.mxu0 %v871
  %1037 = vmatprep.subr.mxu0 %v879
  %1038 = vmatpush1.msra.mxu0 %v878
  %1039 = vmatprep.subr.mxu0 %v886
  %1040 = vmatpush1.msra.mxu0 %v885
  %1041 = vmatprep.subr.mxu0 %v893
  %1042 = vmatpush1.msra.mxu0 %v892
  %1043 = vmatprep.subr.mxu0 %v900
  %1044 = vmatpush1.msra.mxu0 %v899
  %1045 = vmatprep.subr.mxu0 %v907
  %1046 = vmatpush1.msra.mxu0 %v906
  %1047 = vmatprep.subr.mxu0 %v914
  %1048 = vmatpush1.msra.mxu0 %v913
  %1049 = vmatprep.subr.mxu0 0.0
  %1050 = vmatpush1.msra.mxu0 0.0
  %1051 = vmatprep.subr.mxu0 0.0
  %1052 = vmatpush1.msra.mxu0 0.0
  %1053 = vmatprep.subr.mxu0 0.0
  %1054 = vmatpush1.msra.mxu0 0.0
  %1055 = vmatprep.subr.mxu0 0.0
  %1056 = vmatpush1.msra.mxu0 0.0
  %1057 = vmatprep.subr.mxu0 0.0
  %1058 = vmatpush1.msra.mxu0 0.0
  %1059 = vmatprep.subr.mxu0 0.0
  %1060 = vmatpush1.msra.mxu0 0.0
  %1061 = vmatprep.subr.mxu0 0.0
  %1062 = vmatpush1.msra.mxu0 0.0
  %1063 = vmatprep.subr.mxu0 0.0
  %1064 = vmatpush1.msra.mxu0 0.0
  %1065 = vmatprep.mubr.f32.mxu0 %v954
  %1066 = vmatmul.mubr.f32.gmra.mrb[0].mxu0 %v920
  %v1067 = vpop.f32.mrb[0].mxu0
  %v1068 = vadd.f32 0.0, %v1067
  %v1069 = vpop.f32.mrb[0].mxu0
  %v1070 = vadd.f32 0.0, %v1069
  %1071 = vmatprep.mubr.f32.mxu0 %v957
  %1072 = vmatmul.mubr.f32.gmra.mrb[0].mxu0 %v922
  %v1073 = vpop.f32.mrb[0].mxu0
  %v1074 = vadd.f32 0.0, %v1073
  %v1075 = vpop.f32.mrb[0].mxu0
  %v1076 = vadd.f32 0.0, %v1075
  %1077 = vmatprep.mubr.f32.mxu0 %v960
  %1078 = vmatmul.mubr.f32.gmra.mrb[0].mxu0 %v924
  %v1079 = vpop.f32.mrb[0].mxu0
  %v1080 = vadd.f32 0.0, %v1079
  %v1081 = vpop.f32.mrb[0].mxu0
  %v1082 = vadd.f32 0.0, %v1081
  %1083 = vmatprep.mubr.f32.mxu0 %v963
  %1084 = vmatmul.mubr.f32.gmra.mrb[0].mxu0 %v926
  %v1085 = vpop.f32.mrb[0].mxu0
  %v1086 = vadd.f32 0.0, %v1085
  %v1087 = vpop.f32.mrb[0].mxu0
  %v1088 = vadd.f32 0.0, %v1087
  %1089 = vmatprep.mubr.f32.mxu0 %v966
  %1090 = vmatmul.mubr.f32.gmra.mrb[0].mxu0 %v928
  %v1091 = vpop.f32.mrb[0].mxu0
  %v1092 = vadd.f32 0.0, %v1091
  %v1093 = vpop.f32.mrb[0].mxu0
  %v1094 = vadd.f32 0.0, %v1093
  %1095 = vmatprep.mubr.f32.mxu0 %v969
  %1096 = vmatmul.mubr.f32.gmra.mrb[0].mxu0 %v930
  %v1097 = vpop.f32.mrb[0].mxu0
  %v1098 = vadd.f32 0.0, %v1097
  %v1099 = vpop.f32.mrb[0].mxu0
  %v1100 = vadd.f32 0.0, %v1099
  %1101 = vmatprep.mubr.f32.mxu0 %v972
  %1102 = vmatmul.mubr.f32.gmra.mrb[0].mxu0 %v932
  %v1103 = vpop.f32.mrb[0].mxu0
  %v1104 = vadd.f32 0.0, %v1103
  %v1105 = vpop.f32.mrb[0].mxu0
  %v1106 = vadd.f32 0.0, %v1105
  %1107 = vmatprep.mubr.f32.mxu0 %v975
  %1108 = vmatmul.mubr.f32.gmra.mrb[0].mxu0 %v934
  %v1109 = vpop.f32.mrb[0].mxu0
  %v1110 = vadd.f32 0.0, %v1109
  %v1111 = vpop.f32.mrb[0].mxu0
  %v1112 = vadd.f32 0.0, %v1111
  %1113 = vmatprep.mubr.f32.mxu0 %v978
  %1114 = vmatmul.mubr.f32.gmra.mrb[0].mxu0 %v936
  %v1115 = vpop.f32.mrb[0].mxu0
  %v1116 = vadd.f32 0.0, %v1115
  %v1117 = vpop.f32.mrb[0].mxu0
  %v1118 = vadd.f32 0.0, %v1117
  %1119 = vmatprep.mubr.f32.mxu0 %v981
  %1120 = vmatmul.mubr.f32.gmra.mrb[0].mxu0 %v938
  %v1121 = vpop.f32.mrb[0].mxu0
  %v1122 = vadd.f32 0.0, %v1121
  %v1123 = vpop.f32.mrb[0].mxu0
  %v1124 = vadd.f32 0.0, %v1123
  %1125 = vmatprep.mubr.f32.mxu0 %v984
  %1126 = vmatmul.mubr.f32.gmra.mrb[0].mxu0 %v940
  %v1127 = vpop.f32.mrb[0].mxu0
  %v1128 = vadd.f32 0.0, %v1127
  %v1129 = vpop.f32.mrb[0].mxu0
  %v1130 = vadd.f32 0.0, %v1129
  %1131 = vmatprep.mubr.f32.mxu0 %v987
  %1132 = vmatmul.mubr.f32.gmra.mrb[0].mxu0 %v942
  %v1133 = vpop.f32.mrb[0].mxu0
  %v1134 = vadd.f32 0.0, %v1133
  %v1135 = vpop.f32.mrb[0].mxu0
  %v1136 = vadd.f32 0.0, %v1135
  %1137 = vmatprep.mubr.f32.mxu0 %v990
  %1138 = vmatmul.mubr.f32.gmra.mrb[0].mxu0 %v944
  %v1139 = vpop.f32.mrb[0].mxu0
  %v1140 = vadd.f32 0.0, %v1139
  %v1141 = vpop.f32.mrb[0].mxu0
  %v1142 = vadd.f32 0.0, %v1141
  %1143 = vmatprep.mubr.f32.mxu0 %v993
  %1144 = vmatmul.mubr.f32.gmra.mrb[0].mxu0 %v946
  %v1145 = vpop.f32.mrb[0].mxu0
  %v1146 = vadd.f32 0.0, %v1145
  %v1147 = vpop.f32.mrb[0].mxu0
  %v1148 = vadd.f32 0.0, %v1147
  %1149 = vmatprep.mubr.f32.mxu0 %v996
  %1150 = vmatmul.mubr.f32.gmra.mrb[0].mxu0 %v948
  %v1151 = vpop.f32.mrb[0].mxu0
  %v1152 = vadd.f32 0.0, %v1151
  %v1153 = vpop.f32.mrb[0].mxu0
  %v1154 = vadd.f32 0.0, %v1153
  %1155 = vmatprep.mubr.f32.mxu0 %v999
  %1156 = vmatmul.mubr.f32.gmra.mrb[0].mxu0 %v950
  %v1157 = vpop.f32.mrb[0].mxu0
  %v1158 = vadd.f32 0.0, %v1157
  %v1159 = vpop.f32.mrb[0].mxu0
  %v1160 = vadd.f32 0.0, %v1159
  %1161 = vdwg.mxu0
  %1162 = vmatprep.subr.mxu0 %v540
  %1163 = vmatpush1.msra.mxu0 %v539
  %1164 = vmatprep.subr.mxu0 %v547
  %1165 = vmatpush1.msra.mxu0 %v546
  %1166 = vmatprep.subr.mxu0 %v554
  %1167 = vmatpush1.msra.mxu0 %v553
  %1168 = vmatprep.subr.mxu0 %v561
  %1169 = vmatpush1.msra.mxu0 %v560
  %1170 = vmatprep.subr.mxu0 %v568
  %1171 = vmatpush1.msra.mxu0 %v567
  %1172 = vmatprep.subr.mxu0 %v575
  %1173 = vmatpush1.msra.mxu0 %v574
  %1174 = vmatprep.subr.mxu0 %v582
  %1175 = vmatpush1.msra.mxu0 %v581
  %1176 = vmatprep.subr.mxu0 %v589
  %1177 = vmatpush1.msra.mxu0 %v588
  %1178 = vmatprep.subr.mxu0 %v17
  %1179 = vmatpush1.msra.mxu0 %v16
  %1180 = vmatprep.subr.mxu0 %v24
  %1181 = vmatpush1.msra.mxu0 %v23
  %1182 = vmatprep.subr.mxu0 %v31
  %1183 = vmatpush1.msra.mxu0 %v30
  %1184 = vmatprep.subr.mxu0 %v38
  %1185 = vmatpush1.msra.mxu0 %v37
  %1186 = vmatprep.subr.mxu0 %v45
  %1187 = vmatpush1.msra.mxu0 %v44
  %1188 = vmatprep.subr.mxu0 %v52
  %1189 = vmatpush1.msra.mxu0 %v51
  %1190 = vmatprep.subr.mxu0 %v59
  %1191 = vmatpush1.msra.mxu0 %v58
  %1192 = vmatprep.subr.mxu0 %v66
  %1193 = vmatpush1.msra.mxu0 %v65
  %1194 = vmatprep.subr.mxu0 %v867
  %1195 = vmatpush1.msra.mxu0 %v866
  %1196 = vmatprep.subr.mxu0 %v874
  %1197 = vmatpush1.msra.mxu0 %v873
  %1198 = vmatprep.subr.mxu0 %v881
  %1199 = vmatpush1.msra.mxu0 %v880
  %1200 = vmatprep.subr.mxu0 %v888
  %1201 = vmatpush1.msra.mxu0 %v887
  %1202 = vmatprep.subr.mxu0 %v895
  %1203 = vmatpush1.msra.mxu0 %v894
  %1204 = vmatprep.subr.mxu0 %v902
  %1205 = vmatpush1.msra.mxu0 %v901
  %1206 = vmatprep.subr.mxu0 %v909
  %1207 = vmatpush1.msra.mxu0 %v908
  %1208 = vmatprep.subr.mxu0 %v916
  %1209 = vmatpush1.msra.mxu0 %v915
  %1210 = vmatprep.subr.mxu0 0.0
  %1211 = vmatpush1.msra.mxu0 0.0
  %1212 = vmatprep.subr.mxu0 0.0
  %1213 = vmatpush1.msra.mxu0 0.0
  %1214 = vmatprep.subr.mxu0 0.0
  %1215 = vmatpush1.msra.mxu0 0.0
  %1216 = vmatprep.subr.mxu0 0.0
  %1217 = vmatpush1.msra.mxu0 0.0
  %1218 = vmatprep.subr.mxu0 0.0
  %1219 = vmatpush1.msra.mxu0 0.0
  %1220 = vmatprep.subr.mxu0 0.0
  %1221 = vmatpush1.msra.mxu0 0.0
  %1222 = vmatprep.subr.mxu0 0.0
  %1223 = vmatpush1.msra.mxu0 0.0
  %1224 = vmatprep.subr.mxu0 0.0
  %1225 = vmatpush1.msra.mxu0 0.0
  %1226 = vmatprep.mubr.f32.mxu0 %v954
  %1227 = vmatmul.mubr.f32.gmra.mrb[0].mxu0 %v920
  %v1228 = vpop.f32.mrb[0].mxu0
  %v1229 = vadd.f32 0.0, %v1228
  %v1230 = vpop.f32.mrb[0].mxu0
  %v1231 = vadd.f32 0.0, %v1230
  %1232 = vmatprep.mubr.f32.mxu0 %v957
  %1233 = vmatmul.mubr.f32.gmra.mrb[0].mxu0 %v922
  %v1234 = vpop.f32.mrb[0].mxu0
  %v1235 = vadd.f32 0.0, %v1234
  %v1236 = vpop.f32.mrb[0].mxu0
  %v1237 = vadd.f32 0.0, %v1236
  %1238 = vmatprep.mubr.f32.mxu0 %v960
  %1239 = vmatmul.mubr.f32.gmra.mrb[0].mxu0 %v924
  %v1240 = vpop.f32.mrb[0].mxu0
  %v1241 = vadd.f32 0.0, %v1240
  %v1242 = vpop.f32.mrb[0].mxu0
  %v1243 = vadd.f32 0.0, %v1242
  %1244 = vmatprep.mubr.f32.mxu0 %v963
  %1245 = vmatmul.mubr.f32.gmra.mrb[0].mxu0 %v926
  %v1246 = vpop.f32.mrb[0].mxu0
  %v1247 = vadd.f32 0.0, %v1246
  %v1248 = vpop.f32.mrb[0].mxu0
  %v1249 = vadd.f32 0.0, %v1248
  %1250 = vmatprep.mubr.f32.mxu0 %v966
  %1251 = vmatmul.mubr.f32.gmra.mrb[0].mxu0 %v928
  %v1252 = vpop.f32.mrb[0].mxu0
  %v1253 = vadd.f32 0.0, %v1252
  %v1254 = vpop.f32.mrb[0].mxu0
  %v1255 = vadd.f32 0.0, %v1254
  %1256 = vmatprep.mubr.f32.mxu0 %v969
  %1257 = vmatmul.mubr.f32.gmra.mrb[0].mxu0 %v930
  %v1258 = vpop.f32.mrb[0].mxu0
  %v1259 = vadd.f32 0.0, %v1258
  %v1260 = vpop.f32.mrb[0].mxu0
  %v1261 = vadd.f32 0.0, %v1260
  %1262 = vmatprep.mubr.f32.mxu0 %v972
  %1263 = vmatmul.mubr.f32.gmra.mrb[0].mxu0 %v932
  %v1264 = vpop.f32.mrb[0].mxu0
  %v1265 = vadd.f32 0.0, %v1264
  %v1266 = vpop.f32.mrb[0].mxu0
  %v1267 = vadd.f32 0.0, %v1266
  %1268 = vmatprep.mubr.f32.mxu0 %v975
  %1269 = vmatmul.mubr.f32.gmra.mrb[0].mxu0 %v934
  %v1270 = vpop.f32.mrb[0].mxu0
  %v1271 = vadd.f32 0.0, %v1270
  %v1272 = vpop.f32.mrb[0].mxu0
  %v1273 = vadd.f32 0.0, %v1272
  %1274 = vmatprep.mubr.f32.mxu0 %v978
  %1275 = vmatmul.mubr.f32.gmra.mrb[0].mxu0 %v936
  %v1276 = vpop.f32.mrb[0].mxu0
  %v1277 = vadd.f32 0.0, %v1276
  %v1278 = vpop.f32.mrb[0].mxu0
  %v1279 = vadd.f32 0.0, %v1278
  %1280 = vmatprep.mubr.f32.mxu0 %v981
  %1281 = vmatmul.mubr.f32.gmra.mrb[0].mxu0 %v938
  %v1282 = vpop.f32.mrb[0].mxu0
  %v1283 = vadd.f32 0.0, %v1282
  %v1284 = vpop.f32.mrb[0].mxu0
  %v1285 = vadd.f32 0.0, %v1284
  %1286 = vmatprep.mubr.f32.mxu0 %v984
  %1287 = vmatmul.mubr.f32.gmra.mrb[0].mxu0 %v940
  %v1288 = vpop.f32.mrb[0].mxu0
  %v1289 = vadd.f32 0.0, %v1288
  %v1290 = vpop.f32.mrb[0].mxu0
  %v1291 = vadd.f32 0.0, %v1290
  %1292 = vmatprep.mubr.f32.mxu0 %v987
  %1293 = vmatmul.mubr.f32.gmra.mrb[0].mxu0 %v942
  %v1294 = vpop.f32.mrb[0].mxu0
  %v1295 = vadd.f32 0.0, %v1294
  %v1296 = vpop.f32.mrb[0].mxu0
  %v1297 = vadd.f32 0.0, %v1296
  %1298 = vmatprep.mubr.f32.mxu0 %v990
  %1299 = vmatmul.mubr.f32.gmra.mrb[0].mxu0 %v944
  %v1300 = vpop.f32.mrb[0].mxu0
  %v1301 = vadd.f32 0.0, %v1300
  %v1302 = vpop.f32.mrb[0].mxu0
  %v1303 = vadd.f32 0.0, %v1302
  %1304 = vmatprep.mubr.f32.mxu0 %v993
  %1305 = vmatmul.mubr.f32.gmra.mrb[0].mxu0 %v946
  %v1306 = vpop.f32.mrb[0].mxu0
  %v1307 = vadd.f32 0.0, %v1306
  %v1308 = vpop.f32.mrb[0].mxu0
  %v1309 = vadd.f32 0.0, %v1308
  %1310 = vmatprep.mubr.f32.mxu0 %v996
  %1311 = vmatmul.mubr.f32.gmra.mrb[0].mxu0 %v948
  %v1312 = vpop.f32.mrb[0].mxu0
  %v1313 = vadd.f32 0.0, %v1312
  %v1314 = vpop.f32.mrb[0].mxu0
  %v1315 = vadd.f32 0.0, %v1314
  %1316 = vmatprep.mubr.f32.mxu0 %v999
  %1317 = vmatmul.mubr.f32.gmra.mrb[0].mxu0 %v950
  %v1318 = vpop.f32.mrb[0].mxu0
  %v1319 = vadd.f32 0.0, %v1318
  %v1320 = vpop.f32.mrb[0].mxu0
  %v1321 = vadd.f32 0.0, %v1320
  %1322 = vdwg.mxu0
  %1323 = vmatprep.subr.mxu0 %v542
  %1324 = vmatpush1.msra.mxu0 %v541
  %1325 = vmatprep.subr.mxu0 %v549
  %1326 = vmatpush1.msra.mxu0 %v548
  %1327 = vmatprep.subr.mxu0 %v556
  %1328 = vmatpush1.msra.mxu0 %v555
  %1329 = vmatprep.subr.mxu0 %v563
  %1330 = vmatpush1.msra.mxu0 %v562
  %1331 = vmatprep.subr.mxu0 %v570
  %1332 = vmatpush1.msra.mxu0 %v569
  %1333 = vmatprep.subr.mxu0 %v577
  %1334 = vmatpush1.msra.mxu0 %v576
  %1335 = vmatprep.subr.mxu0 %v584
  %1336 = vmatpush1.msra.mxu0 %v583
  %1337 = vmatprep.subr.mxu0 %v591
  %1338 = vmatpush1.msra.mxu0 %v590
  %1339 = vmatprep.subr.mxu0 %v19
  %1340 = vmatpush1.msra.mxu0 %v18
  %1341 = vmatprep.subr.mxu0 %v26
  %1342 = vmatpush1.msra.mxu0 %v25
  %1343 = vmatprep.subr.mxu0 %v33
  %1344 = vmatpush1.msra.mxu0 %v32
  %1345 = vmatprep.subr.mxu0 %v40
  %1346 = vmatpush1.msra.mxu0 %v39
  %1347 = vmatprep.subr.mxu0 %v47
  %1348 = vmatpush1.msra.mxu0 %v46
  %1349 = vmatprep.subr.mxu0 %v54
  %1350 = vmatpush1.msra.mxu0 %v53
  %1351 = vmatprep.subr.mxu0 %v61
  %1352 = vmatpush1.msra.mxu0 %v60
  %1353 = vmatprep.subr.mxu0 %v68
  %1354 = vmatpush1.msra.mxu0 %v67
  %1355 = vmatprep.subr.mxu0 %v869
  %1356 = vmatpush1.msra.mxu0 %v868
  %1357 = vmatprep.subr.mxu0 %v876
  %1358 = vmatpush1.msra.mxu0 %v875
  %1359 = vmatprep.subr.mxu0 %v883
  %1360 = vmatpush1.msra.mxu0 %v882
  %1361 = vmatprep.subr.mxu0 %v890
  %1362 = vmatpush1.msra.mxu0 %v889
  %1363 = vmatprep.subr.mxu0 %v897
  %1364 = vmatpush1.msra.mxu0 %v896
  %1365 = vmatprep.subr.mxu0 %v904
  %1366 = vmatpush1.msra.mxu0 %v903
  %1367 = vmatprep.subr.mxu0 %v911
  %1368 = vmatpush1.msra.mxu0 %v910
  %1369 = vmatprep.subr.mxu0 %v918
  %1370 = vmatpush1.msra.mxu0 %v917
  %1371 = vmatprep.subr.mxu0 0.0
  %1372 = vmatpush1.msra.mxu0 0.0
  %1373 = vmatprep.subr.mxu0 0.0
  %1374 = vmatpush1.msra.mxu0 0.0
  %1375 = vmatprep.subr.mxu0 0.0
  %1376 = vmatpush1.msra.mxu0 0.0
  %1377 = vmatprep.subr.mxu0 0.0
  %1378 = vmatpush1.msra.mxu0 0.0
  %1379 = vmatprep.subr.mxu0 0.0
  %1380 = vmatpush1.msra.mxu0 0.0
  %1381 = vmatprep.subr.mxu0 0.0
  %1382 = vmatpush1.msra.mxu0 0.0
  %1383 = vmatprep.subr.mxu0 0.0
  %1384 = vmatpush1.msra.mxu0 0.0
  %1385 = vmatprep.subr.mxu0 0.0
  %1386 = vmatpush1.msra.mxu0 0.0
  %1387 = vmatprep.mubr.f32.mxu0 %v954
  %1388 = vmatmul.mubr.f32.gmra.mrb[0].mxu0 %v920
  %v1389 = vpop.f32.mrb[0].mxu0
  %v1390 = vadd.f32 0.0, %v1389
  %v1391 = vpop.f32.mrb[0].mxu0
  %v1392 = vadd.f32 0.0, %v1391
  %1393 = vmatprep.mubr.f32.mxu0 %v957
  %1394 = vmatmul.mubr.f32.gmra.mrb[0].mxu0 %v922
  %v1395 = vpop.f32.mrb[0].mxu0
  %v1396 = vadd.f32 0.0, %v1395
  %v1397 = vpop.f32.mrb[0].mxu0
  %v1398 = vadd.f32 0.0, %v1397
  %1399 = vmatprep.mubr.f32.mxu0 %v960
  %1400 = vmatmul.mubr.f32.gmra.mrb[0].mxu0 %v924
  %v1401 = vpop.f32.mrb[0].mxu0
  %v1402 = vadd.f32 0.0, %v1401
  %v1403 = vpop.f32.mrb[0].mxu0
  %v1404 = vadd.f32 0.0, %v1403
  %1405 = vmatprep.mubr.f32.mxu0 %v963
  %1406 = vmatmul.mubr.f32.gmra.mrb[0].mxu0 %v926
  %v1407 = vpop.f32.mrb[0].mxu0
  %v1408 = vadd.f32 0.0, %v1407
  %v1409 = vpop.f32.mrb[0].mxu0
  %v1410 = vadd.f32 0.0, %v1409
  %1411 = vmatprep.mubr.f32.mxu0 %v966
  %1412 = vmatmul.mubr.f32.gmra.mrb[0].mxu0 %v928
  %v1413 = vpop.f32.mrb[0].mxu0
  %v1414 = vadd.f32 0.0, %v1413
  %v1415 = vpop.f32.mrb[0].mxu0
  %v1416 = vadd.f32 0.0, %v1415
  %1417 = vmatprep.mubr.f32.mxu0 %v969
  %1418 = vmatmul.mubr.f32.gmra.mrb[0].mxu0 %v930
  %v1419 = vpop.f32.mrb[0].mxu0
  %v1420 = vadd.f32 0.0, %v1419
  %v1421 = vpop.f32.mrb[0].mxu0
  %v1422 = vadd.f32 0.0, %v1421
  %1423 = vmatprep.mubr.f32.mxu0 %v972
  %1424 = vmatmul.mubr.f32.gmra.mrb[0].mxu0 %v932
  %v1425 = vpop.f32.mrb[0].mxu0
  %v1426 = vadd.f32 0.0, %v1425
  %v1427 = vpop.f32.mrb[0].mxu0
  %v1428 = vadd.f32 0.0, %v1427
  %1429 = vmatprep.mubr.f32.mxu0 %v975
  %1430 = vmatmul.mubr.f32.gmra.mrb[0].mxu0 %v934
  %v1431 = vpop.f32.mrb[0].mxu0
  %v1432 = vadd.f32 0.0, %v1431
  %v1433 = vpop.f32.mrb[0].mxu0
  %v1434 = vadd.f32 0.0, %v1433
  %1435 = vmatprep.mubr.f32.mxu0 %v978
  %1436 = vmatmul.mubr.f32.gmra.mrb[0].mxu0 %v936
  %v1437 = vpop.f32.mrb[0].mxu0
  %v1438 = vadd.f32 0.0, %v1437
  %v1439 = vpop.f32.mrb[0].mxu0
  %v1440 = vadd.f32 0.0, %v1439
  %1441 = vmatprep.mubr.f32.mxu0 %v981
  %1442 = vmatmul.mubr.f32.gmra.mrb[0].mxu0 %v938
  %v1443 = vpop.f32.mrb[0].mxu0
  %v1444 = vadd.f32 0.0, %v1443
  %v1445 = vpop.f32.mrb[0].mxu0
  %v1446 = vadd.f32 0.0, %v1445
  %1447 = vmatprep.mubr.f32.mxu0 %v984
  %1448 = vmatmul.mubr.f32.gmra.mrb[0].mxu0 %v940
  %v1449 = vpop.f32.mrb[0].mxu0
  %v1450 = vadd.f32 0.0, %v1449
  %v1451 = vpop.f32.mrb[0].mxu0
  %v1452 = vadd.f32 0.0, %v1451
  %1453 = vmatprep.mubr.f32.mxu0 %v987
  %1454 = vmatmul.mubr.f32.gmra.mrb[0].mxu0 %v942
  %v1455 = vpop.f32.mrb[0].mxu0
  %v1456 = vadd.f32 0.0, %v1455
  %v1457 = vpop.f32.mrb[0].mxu0
  %v1458 = vadd.f32 0.0, %v1457
  %1459 = vmatprep.mubr.f32.mxu0 %v990
  %1460 = vmatmul.mubr.f32.gmra.mrb[0].mxu0 %v944
  %v1461 = vpop.f32.mrb[0].mxu0
  %v1462 = vadd.f32 0.0, %v1461
  %v1463 = vpop.f32.mrb[0].mxu0
  %v1464 = vadd.f32 0.0, %v1463
  %1465 = vmatprep.mubr.f32.mxu0 %v993
  %1466 = vmatmul.mubr.f32.gmra.mrb[0].mxu0 %v946
  %v1467 = vpop.f32.mrb[0].mxu0
  %v1468 = vadd.f32 0.0, %v1467
  %v1469 = vpop.f32.mrb[0].mxu0
  %v1470 = vadd.f32 0.0, %v1469
  %1471 = vmatprep.mubr.f32.mxu0 %v996
  %1472 = vmatmul.mubr.f32.gmra.mrb[0].mxu0 %v948
  %v1473 = vpop.f32.mrb[0].mxu0
  %v1474 = vadd.f32 0.0, %v1473
  %v1475 = vpop.f32.mrb[0].mxu0
  %v1476 = vadd.f32 0.0, %v1475
  %1477 = vmatprep.mubr.f32.mxu0 %v999
  %1478 = vmatmul.mubr.f32.gmra.mrb[0].mxu0 %v950
  %v1479 = vpop.f32.mrb[0].mxu0
  %v1480 = vadd.f32 0.0, %v1479
  %v1481 = vpop.f32.mrb[0].mxu0
  %v1482 = vadd.f32 0.0, %v1481
  %1483 = vdwg.mxu0
  %1484 = vmatprep.subr.mxu0 0.0
  %1485 = vmatpush1.msra.mxu0 %v543
  %1486 = vmatprep.subr.mxu0 0.0
  %1487 = vmatpush1.msra.mxu0 %v550
  %1488 = vmatprep.subr.mxu0 0.0
  %1489 = vmatpush1.msra.mxu0 %v557
  %1490 = vmatprep.subr.mxu0 0.0
  %1491 = vmatpush1.msra.mxu0 %v564
  %1492 = vmatprep.subr.mxu0 0.0
  %1493 = vmatpush1.msra.mxu0 %v571
  %1494 = vmatprep.subr.mxu0 0.0
  %1495 = vmatpush1.msra.mxu0 %v578
  %1496 = vmatprep.subr.mxu0 0.0
  %1497 = vmatpush1.msra.mxu0 %v585
  %1498 = vmatprep.subr.mxu0 0.0
  %1499 = vmatpush1.msra.mxu0 %v592
  %1500 = vmatprep.subr.mxu0 0.0
  %1501 = vmatpush1.msra.mxu0 %v20
  %1502 = vmatprep.subr.mxu0 0.0
  %1503 = vmatpush1.msra.mxu0 %v27
  %1504 = vmatprep.subr.mxu0 0.0
  %1505 = vmatpush1.msra.mxu0 %v34
  %1506 = vmatprep.subr.mxu0 0.0
  %1507 = vmatpush1.msra.mxu0 %v41
  %1508 = vmatprep.subr.mxu0 0.0
  %1509 = vmatpush1.msra.mxu0 %v48
  %1510 = vmatprep.subr.mxu0 0.0
  %1511 = vmatpush1.msra.mxu0 %v55
  %1512 = vmatprep.subr.mxu0 0.0
  %1513 = vmatpush1.msra.mxu0 %v62
  %1514 = vmatprep.subr.mxu0 0.0
  %1515 = vmatpush1.msra.mxu0 %v69
  %1516 = vmatprep.subr.mxu0 0.0
  %1517 = vmatpush1.msra.mxu0 %v870
  %1518 = vmatprep.subr.mxu0 0.0
  %1519 = vmatpush1.msra.mxu0 %v877
  %1520 = vmatprep.subr.mxu0 0.0
  %1521 = vmatpush1.msra.mxu0 %v884
  %1522 = vmatprep.subr.mxu0 0.0
  %1523 = vmatpush1.msra.mxu0 %v891
  %1524 = vmatprep.subr.mxu0 0.0
  %1525 = vmatpush1.msra.mxu0 %v898
  %1526 = vmatprep.subr.mxu0 0.0
  %1527 = vmatpush1.msra.mxu0 %v905
  %1528 = vmatprep.subr.mxu0 0.0
  %1529 = vmatpush1.msra.mxu0 %v912
  %1530 = vmatprep.subr.mxu0 0.0
  %1531 = vmatpush1.msra.mxu0 %v919
  %1532 = vmatprep.subr.mxu0 0.0
  %1533 = vmatpush1.msra.mxu0 0.0
  %1534 = vmatprep.subr.mxu0 0.0
  %1535 = vmatpush1.msra.mxu0 0.0
  %1536 = vmatprep.subr.mxu0 0.0
  %1537 = vmatpush1.msra.mxu0 0.0
  %1538 = vmatprep.subr.mxu0 0.0
  %1539 = vmatpush1.msra.mxu0 0.0
  %1540 = vmatprep.subr.mxu0 0.0
  %1541 = vmatpush1.msra.mxu0 0.0
  %1542 = vmatprep.subr.mxu0 0.0
  %1543 = vmatpush1.msra.mxu0 0.0
  %1544 = vmatprep.subr.mxu0 0.0
  %1545 = vmatpush1.msra.mxu0 0.0
  %1546 = vmatprep.subr.mxu0 0.0
  %1547 = vmatpush1.msra.mxu0 0.0
  %1548 = vmatprep.mubr.f32.mxu0 %v954
  %1549 = vmatmul.mubr.f32.gmra.mrb[0].mxu0 %v920
  %v1550 = vpop.f32.mrb[0].mxu0
  %v1551 = vadd.f32 0.0, %v1550
  %v1552 = vpop.f32.mrb[0].mxu0
  %1553 = vmatprep.mubr.f32.mxu0 %v957
  %1554 = vmatmul.mubr.f32.gmra.mrb[0].mxu0 %v922
  %v1555 = vpop.f32.mrb[0].mxu0
  %v1556 = vadd.f32 0.0, %v1555
  %v1557 = vpop.f32.mrb[0].mxu0
  %1558 = vmatprep.mubr.f32.mxu0 %v960
  %1559 = vmatmul.mubr.f32.gmra.mrb[0].mxu0 %v924
  %v1560 = vpop.f32.mrb[0].mxu0
  %v1561 = vadd.f32 0.0, %v1560
  %v1562 = vpop.f32.mrb[0].mxu0
  %1563 = vmatprep.mubr.f32.mxu0 %v963
  %1564 = vmatmul.mubr.f32.gmra.mrb[0].mxu0 %v926
  %v1565 = vpop.f32.mrb[0].mxu0
  %v1566 = vadd.f32 0.0, %v1565
  %v1567 = vpop.f32.mrb[0].mxu0
  %1568 = vmatprep.mubr.f32.mxu0 %v966
  %1569 = vmatmul.mubr.f32.gmra.mrb[0].mxu0 %v928
  %v1570 = vpop.f32.mrb[0].mxu0
  %v1571 = vadd.f32 0.0, %v1570
  %v1572 = vpop.f32.mrb[0].mxu0
  %1573 = vmatprep.mubr.f32.mxu0 %v969
  %1574 = vmatmul.mubr.f32.gmra.mrb[0].mxu0 %v930
  %v1575 = vpop.f32.mrb[0].mxu0
  %v1576 = vadd.f32 0.0, %v1575
  %v1577 = vpop.f32.mrb[0].mxu0
  %1578 = vmatprep.mubr.f32.mxu0 %v972
  %1579 = vmatmul.mubr.f32.gmra.mrb[0].mxu0 %v932
  %v1580 = vpop.f32.mrb[0].mxu0
  %v1581 = vadd.f32 0.0, %v1580
  %v1582 = vpop.f32.mrb[0].mxu0
  %1583 = vmatprep.mubr.f32.mxu0 %v975
  %1584 = vmatmul.mubr.f32.gmra.mrb[0].mxu0 %v934
  %v1585 = vpop.f32.mrb[0].mxu0
  %v1586 = vadd.f32 0.0, %v1585
  %v1587 = vpop.f32.mrb[0].mxu0
  %1588 = vmatprep.mubr.f32.mxu0 %v978
  %1589 = vmatmul.mubr.f32.gmra.mrb[0].mxu0 %v936
  %v1590 = vpop.f32.mrb[0].mxu0
  %v1591 = vadd.f32 0.0, %v1590
  %v1592 = vpop.f32.mrb[0].mxu0
  %1593 = vmatprep.mubr.f32.mxu0 %v981
  %1594 = vmatmul.mubr.f32.gmra.mrb[0].mxu0 %v938
  %v1595 = vpop.f32.mrb[0].mxu0
  %v1596 = vadd.f32 0.0, %v1595
  %v1597 = vpop.f32.mrb[0].mxu0
  %1598 = vmatprep.mubr.f32.mxu0 %v984
  %1599 = vmatmul.mubr.f32.gmra.mrb[0].mxu0 %v940
  %v1600 = vpop.f32.mrb[0].mxu0
  %v1601 = vadd.f32 0.0, %v1600
  %v1602 = vpop.f32.mrb[0].mxu0
  %1603 = vmatprep.mubr.f32.mxu0 %v987
  %1604 = vmatmul.mubr.f32.gmra.mrb[0].mxu0 %v942
  %v1605 = vpop.f32.mrb[0].mxu0
  %v1606 = vadd.f32 0.0, %v1605
  %v1607 = vpop.f32.mrb[0].mxu0
  %1608 = vmatprep.mubr.f32.mxu0 %v990
  %1609 = vmatmul.mubr.f32.gmra.mrb[0].mxu0 %v944
  %v1610 = vpop.f32.mrb[0].mxu0
  %v1611 = vadd.f32 0.0, %v1610
  %v1612 = vpop.f32.mrb[0].mxu0
  %1613 = vmatprep.mubr.f32.mxu0 %v993
  %1614 = vmatmul.mubr.f32.gmra.mrb[0].mxu0 %v946
  %v1615 = vpop.f32.mrb[0].mxu0
  %v1616 = vadd.f32 0.0, %v1615
  %v1617 = vpop.f32.mrb[0].mxu0
  %1618 = vmatprep.mubr.f32.mxu0 %v996
  %1619 = vmatmul.mubr.f32.gmra.mrb[0].mxu0 %v948
  %v1620 = vpop.f32.mrb[0].mxu0
  %v1621 = vadd.f32 0.0, %v1620
  %v1622 = vpop.f32.mrb[0].mxu0
  %1623 = vmatprep.mubr.f32.mxu0 %v999
  %1624 = vmatmul.mubr.f32.gmra.mrb[0].mxu0 %v950
  %v1625 = vpop.f32.mrb[0].mxu0
  %v1626 = vadd.f32 0.0, %v1625
  %v1627 = vpop.f32.mrb[0].mxu0
  %1628 = vdwg.mxu0
  %v1629 = vld [vmem:[%s2] sm:$0xff]
  %v1630 = vld [vmem:[%s2 + $0x8] sm:$0xff]
  %v1631 = vld [vmem:[%s2 + $0x10] sm:$0xff]
  %v1632 = vld [vmem:[%s2 + $0x18] sm:$0xff]
  %v1633 = vld [vmem:[%s2 + $0x20] sm:$0xff]
  %v1634 = vld [vmem:[%s2 + $0x28] sm:$0xff]
  %v1635 = vld [vmem:[%s2 + $0x30] sm:$0xff]
  %v1636 = vld [vmem:[%s2 + $0x38] sm:$0xff]
  %v1637 = vld [vmem:[%s2 + $0x40] sm:$0xff]
  %v1638 = vld [vmem:[%s2 + $0x48] sm:$0xff]
  %v1639 = vld [vmem:[%s2 + $0x50] sm:$0xff]
  %v1640 = vld [vmem:[%s2 + $0x58] sm:$0xff]
  %v1641 = vld [vmem:[%s2 + $0x60] sm:$0xff]
  %v1642 = vld [vmem:[%s2 + $0x68] sm:$0xff]
  %v1643 = vld [vmem:[%s2 + $0x70] sm:$0xff]
  %v1644 = vld [vmem:[%s2 + $0x78] sm:$0xff]
  %1677 = vrot.lane.b32.xlu0 %v1392, 12
  %v1678 = vpop.permute.xlu0 %1677
  %1679 = vrot.lane.b32.xlu0 %v1551, 12
  %v1680 = vpop.permute.xlu0 %1679
  %1681 = vrot.lane.b32.xlu0 %v1398, 12
  %v1682 = vpop.permute.xlu0 %1681
  %1683 = vrot.lane.b32.xlu0 %v1556, 12
  %v1684 = vpop.permute.xlu0 %1683
  %1685 = vrot.lane.b32.xlu0 %v1404, 12
  %v1686 = vpop.permute.xlu0 %1685
  %1687 = vrot.lane.b32.xlu0 %v1561, 12
  %v1688 = vpop.permute.xlu0 %1687
  %1689 = vrot.lane.b32.xlu0 %v1410, 12
  %v1690 = vpop.permute.xlu0 %1689
  %1691 = vrot.lane.b32.xlu0 %v1566, 12
  %v1692 = vpop.permute.xlu0 %1691
  %1693 = vrot.lane.b32.xlu0 %v1416, 12
  %v1694 = vpop.permute.xlu0 %1693
  %1695 = vrot.lane.b32.xlu0 %v1571, 12
  %v1696 = vpop.permute.xlu0 %1695
  %1697 = vrot.lane.b32.xlu0 %v1422, 12
  %v1698 = vpop.permute.xlu0 %1697
  %1699 = vrot.lane.b32.xlu0 %v1576, 12
  %v1700 = vpop.permute.xlu0 %1699
  %1701 = vrot.lane.b32.xlu0 %v1428, 12
  %v1702 = vpop.permute.xlu0 %1701
  %1703 = vrot.lane.b32.xlu0 %v1581, 12
  %v1704 = vpop.permute.xlu0 %1703
  %1705 = vrot.lane.b32.xlu0 %v1434, 12
  %v1706 = vpop.permute.xlu0 %1705
  %1707 = vrot.lane.b32.xlu0 %v1586, 12
  %v1708 = vpop.permute.xlu0 %1707
  %1709 = vrot.lane.b32.xlu0 %v1440, 12
  %v1710 = vpop.permute.xlu0 %1709
  %1711 = vrot.lane.b32.xlu0 %v1591, 12
  %v1712 = vpop.permute.xlu0 %1711
  %1713 = vrot.lane.b32.xlu0 %v1446, 12
  %v1714 = vpop.permute.xlu0 %1713
  %1715 = vrot.lane.b32.xlu0 %v1596, 12
  %v1716 = vpop.permute.xlu0 %1715
  %1717 = vrot.lane.b32.xlu0 %v1452, 12
  %v1718 = vpop.permute.xlu0 %1717
  %1719 = vrot.lane.b32.xlu0 %v1601, 12
  %v1720 = vpop.permute.xlu0 %1719
  %1721 = vrot.lane.b32.xlu0 %v1458, 12
  %v1722 = vpop.permute.xlu0 %1721
  %1723 = vrot.lane.b32.xlu0 %v1606, 12
  %v1724 = vpop.permute.xlu0 %1723
  %1725 = vrot.lane.b32.xlu0 %v1464, 12
  %v1726 = vpop.permute.xlu0 %1725
  %1727 = vrot.lane.b32.xlu0 %v1611, 12
  %v1728 = vpop.permute.xlu0 %1727
  %1729 = vrot.lane.b32.xlu0 %v1470, 12
  %v1730 = vpop.permute.xlu0 %1729
  %1731 = vrot.lane.b32.xlu0 %v1616, 12
  %v1732 = vpop.permute.xlu0 %1731
  %1733 = vrot.lane.b32.xlu0 %v1476, 12
  %v1734 = vpop.permute.xlu0 %1733
  %1735 = vrot.lane.b32.xlu0 %v1621, 12
  %v1736 = vpop.permute.xlu0 %1735
  %1737 = vrot.lane.b32.xlu0 %v1482, 12
  %v1738 = vpop.permute.xlu0 %1737
  %1739 = vrot.lane.b32.xlu0 %v1626, 12
  %v1740 = vpop.permute.xlu0 %1739
  %vm1741 = vcmask 97280
  %v1742 = vsel %vm1741, %v1678, %v1680
  %v1743 = vsel %vm1741, %v1682, %v1684
  %v1744 = vsel %vm1741, %v1686, %v1688
  %v1745 = vsel %vm1741, %v1690, %v1692
  %v1746 = vsel %vm1741, %v1694, %v1696
  %v1747 = vsel %vm1741, %v1698, %v1700
  %v1748 = vsel %vm1741, %v1702, %v1704
  %v1749 = vsel %vm1741, %v1706, %v1708
  %v1750 = vsel %vm1741, %v1710, %v1712
  %v1751 = vsel %vm1741, %v1714, %v1716
  %v1752 = vsel %vm1741, %v1718, %v1720
  %v1753 = vsel %vm1741, %v1722, %v1724
  %v1754 = vsel %vm1741, %v1726, %v1728
  %v1755 = vsel %vm1741, %v1730, %v1732
  %v1756 = vsel %vm1741, %v1734, %v1736
  %v1757 = vsel %vm1741, %v1738, %v1740
  %1854 = vrot.lane.b32.xlu0 %v1068, 28
  %v1855 = vpop.permute.xlu0 %1854
  %1856 = vrot.lane.b32.xlu0 %v1070, 28
  %v1857 = vpop.permute.xlu0 %1856
  %1858 = vrot.lane.b32.xlu0 %v1229, 28
  %v1859 = vpop.permute.xlu0 %1858
  %1860 = vrot.lane.b32.xlu0 %v1231, 28
  %v1861 = vpop.permute.xlu0 %1860
  %1862 = vrot.lane.b32.xlu0 %v1390, 28
  %v1863 = vpop.permute.xlu0 %1862
  %1864 = vrot.lane.b32.xlu0 %v1392, 28
  %v1865 = vpop.permute.xlu0 %1864
  %1866 = vrot.lane.b32.xlu0 %v1074, 28
  %v1867 = vpop.permute.xlu0 %1866
  %1868 = vrot.lane.b32.xlu0 %v1076, 28
  %v1869 = vpop.permute.xlu0 %1868
  %1870 = vrot.lane.b32.xlu0 %v1235, 28
  %v1871 = vpop.permute.xlu0 %1870
  %1872 = vrot.lane.b32.xlu0 %v1237, 28
  %v1873 = vpop.permute.xlu0 %1872
  %1874 = vrot.lane.b32.xlu0 %v1396, 28
  %v1875 = vpop.permute.xlu0 %1874
  %1876 = vrot.lane.b32.xlu0 %v1398, 28
  %v1877 = vpop.permute.xlu0 %1876
  %1878 = vrot.lane.b32.xlu0 %v1080, 28
  %v1879 = vpop.permute.xlu0 %1878
  %1880 = vrot.lane.b32.xlu0 %v1082, 28
  %v1881 = vpop.permute.xlu0 %1880
  %1882 = vrot.lane.b32.xlu0 %v1241, 28
  %v1883 = vpop.permute.xlu0 %1882
  %1884 = vrot.lane.b32.xlu0 %v1243, 28
  %v1885 = vpop.permute.xlu0 %1884
  %1886 = vrot.lane.b32.xlu0 %v1402, 28
  %v1887 = vpop.permute.xlu0 %1886
  %1888 = vrot.lane.b32.xlu0 %v1404, 28
  %v1889 = vpop.permute.xlu0 %1888
  %1890 = vrot.lane.b32.xlu0 %v1086, 28
  %v1891 = vpop.permute.xlu0 %1890
  %1892 = vrot.lane.b32.xlu0 %v1088, 28
  %v1893 = vpop.permute.xlu0 %1892
  %1894 = vrot.lane.b32.xlu0 %v1247, 28
  %v1895 = vpop.permute.xlu0 %1894
  %1896 = vrot.lane.b32.xlu0 %v1249, 28
  %v1897 = vpop.permute.xlu0 %1896
  %1898 = vrot.lane.b32.xlu0 %v1408, 28
  %v1899 = vpop.permute.xlu0 %1898
  %1900 = vrot.lane.b32.xlu0 %v1410, 28
  %v1901 = vpop.permute.xlu0 %1900
  %1902 = vrot.lane.b32.xlu0 %v1092, 28
  %v1903 = vpop.permute.xlu0 %1902
  %1904 = vrot.lane.b32.xlu0 %v1094, 28
  %v1905 = vpop.permute.xlu0 %1904
  %1906 = vrot.lane.b32.xlu0 %v1253, 28
  %v1907 = vpop.permute.xlu0 %1906
  %1908 = vrot.lane.b32.xlu0 %v1255, 28
  %v1909 = vpop.permute.xlu0 %1908
  %1910 = vrot.lane.b32.xlu0 %v1414, 28
  %v1911 = vpop.permute.xlu0 %1910
  %1912 = vrot.lane.b32.xlu0 %v1416, 28
  %v1913 = vpop.permute.xlu0 %1912
  %1914 = vrot.lane.b32.xlu0 %v1098, 28
  %v1915 = vpop.permute.xlu0 %1914
  %1916 = vrot.lane.b32.xlu0 %v1100, 28
  %v1917 = vpop.permute.xlu0 %1916
  %1918 = vrot.lane.b32.xlu0 %v1259, 28
  %v1919 = vpop.permute.xlu0 %1918
  %1920 = vrot.lane.b32.xlu0 %v1261, 28
  %v1921 = vpop.permute.xlu0 %1920
  %1922 = vrot.lane.b32.xlu0 %v1420, 28
  %v1923 = vpop.permute.xlu0 %1922
  %1924 = vrot.lane.b32.xlu0 %v1422, 28
  %v1925 = vpop.permute.xlu0 %1924
  %1926 = vrot.lane.b32.xlu0 %v1104, 28
  %v1927 = vpop.permute.xlu0 %1926
  %1928 = vrot.lane.b32.xlu0 %v1106, 28
  %v1929 = vpop.permute.xlu0 %1928
  %1930 = vrot.lane.b32.xlu0 %v1265, 28
  %v1931 = vpop.permute.xlu0 %1930
  %1932 = vrot.lane.b32.xlu0 %v1267, 28
  %v1933 = vpop.permute.xlu0 %1932
  %1934 = vrot.lane.b32.xlu0 %v1426, 28
  %v1935 = vpop.permute.xlu0 %1934
  %1936 = vrot.lane.b32.xlu0 %v1428, 28
  %v1937 = vpop.permute.xlu0 %1936
  %1938 = vrot.lane.b32.xlu0 %v1110, 28
  %v1939 = vpop.permute.xlu0 %1938
  %1940 = vrot.lane.b32.xlu0 %v1112, 28
  %v1941 = vpop.permute.xlu0 %1940
  %1942 = vrot.lane.b32.xlu0 %v1271, 28
  %v1943 = vpop.permute.xlu0 %1942
  %1944 = vrot.lane.b32.xlu0 %v1273, 28
  %v1945 = vpop.permute.xlu0 %1944
  %1946 = vrot.lane.b32.xlu0 %v1432, 28
  %v1947 = vpop.permute.xlu0 %1946
  %1948 = vrot.lane.b32.xlu0 %v1434, 28
  %v1949 = vpop.permute.xlu0 %1948
  %1950 = vrot.lane.b32.xlu0 %v1116, 28
  %v1951 = vpop.permute.xlu0 %1950
  %1952 = vrot.lane.b32.xlu0 %v1118, 28
  %v1953 = vpop.permute.xlu0 %1952
  %1954 = vrot.lane.b32.xlu0 %v1277, 28
  %v1955 = vpop.permute.xlu0 %1954
  %1956 = vrot.lane.b32.xlu0 %v1279, 28
  %v1957 = vpop.permute.xlu0 %1956
  %1958 = vrot.lane.b32.xlu0 %v1438, 28
  %v1959 = vpop.permute.xlu0 %1958
  %1960 = vrot.lane.b32.xlu0 %v1440, 28
  %v1961 = vpop.permute.xlu0 %1960
  %1962 = vrot.lane.b32.xlu0 %v1122, 28
  %v1963 = vpop.permute.xlu0 %1962
  %1964 = vrot.lane.b32.xlu0 %v1124, 28
  %v1965 = vpop.permute.xlu0 %1964
  %1966 = vrot.lane.b32.xlu0 %v1283, 28
  %v1967 = vpop.permute.xlu0 %1966
  %1968 = vrot.lane.b32.xlu0 %v1285, 28
  %v1969 = vpop.permute.xlu0 %1968
  %1970 = vrot.lane.b32.xlu0 %v1444, 28
  %v1971 = vpop.permute.xlu0 %1970
  %1972 = vrot.lane.b32.xlu0 %v1446, 28
  %v1973 = vpop.permute.xlu0 %1972
  %1974 = vrot.lane.b32.xlu0 %v1128, 28
  %v1975 = vpop.permute.xlu0 %1974
  %1976 = vrot.lane.b32.xlu0 %v1130, 28
  %v1977 = vpop.permute.xlu0 %1976
  %1978 = vrot.lane.b32.xlu0 %v1289, 28
  %v1979 = vpop.permute.xlu0 %1978
  %1980 = vrot.lane.b32.xlu0 %v1291, 28
  %v1981 = vpop.permute.xlu0 %1980
  %1982 = vrot.lane.b32.xlu0 %v1450, 28
  %v1983 = vpop.permute.xlu0 %1982
  %1984 = vrot.lane.b32.xlu0 %v1452, 28
  %v1985 = vpop.permute.xlu0 %1984
  %1986 = vrot.lane.b32.xlu0 %v1134, 28
  %v1987 = vpop.permute.xlu0 %1986
  %1988 = vrot.lane.b32.xlu0 %v1136, 28
  %v1989 = vpop.permute.xlu0 %1988
  %1990 = vrot.lane.b32.xlu0 %v1295, 28
  %v1991 = vpop.permute.xlu0 %1990
  %1992 = vrot.lane.b32.xlu0 %v1297, 28
  %v1993 = vpop.permute.xlu0 %1992
  %1994 = vrot.lane.b32.xlu0 %v1456, 28
  %v1995 = vpop.permute.xlu0 %1994
  %1996 = vrot.lane.b32.xlu0 %v1458, 28
  %v1997 = vpop.permute.xlu0 %1996
  %1998 = vrot.lane.b32.xlu0 %v1140, 28
  %v1999 = vpop.permute.xlu0 %1998
  %2000 = vrot.lane.b32.xlu0 %v1142, 28
  %v2001 = vpop.permute.xlu0 %2000
  %2002 = vrot.lane.b32.xlu0 %v1301, 28
  %v2003 = vpop.permute.xlu0 %2002
  %2004 = vrot.lane.b32.xlu0 %v1303, 28
  %v2005 = vpop.permute.xlu0 %2004
  %2006 = vrot.lane.b32.xlu0 %v1462, 28
  %v2007 = vpop.permute.xlu0 %2006
  %2008 = vrot.lane.b32.xlu0 %v1464, 28
  %v2009 = vpop.permute.xlu0 %2008
  %2010 = vrot.lane.b32.xlu0 %v1146, 28
  %v2011 = vpop.permute.xlu0 %2010
  %2012 = vrot.lane.b32.xlu0 %v1148, 28
  %v2013 = vpop.permute.xlu0 %2012
  %2014 = vrot.lane.b32.xlu0 %v1307, 28
  %v2015 = vpop.permute.xlu0 %2014
  %2016 = vrot.lane.b32.xlu0 %v1309, 28
  %v2017 = vpop.permute.xlu0 %2016
  %2018 = vrot.lane.b32.xlu0 %v1468, 28
  %v2019 = vpop.permute.xlu0 %2018
  %2020 = vrot.lane.b32.xlu0 %v1470, 28
  %v2021 = vpop.permute.xlu0 %2020
  %2022 = vrot.lane.b32.xlu0 %v1152, 28
  %v2023 = vpop.permute.xlu0 %2022
  %2024 = vrot.lane.b32.xlu0 %v1154, 28
  %v2025 = vpop.permute.xlu0 %2024
  %2026 = vrot.lane.b32.xlu0 %v1313, 28
  %v2027 = vpop.permute.xlu0 %2026
  %2028 = vrot.lane.b32.xlu0 %v1315, 28
  %v2029 = vpop.permute.xlu0 %2028
  %2030 = vrot.lane.b32.xlu0 %v1474, 28
  %v2031 = vpop.permute.xlu0 %2030
  %2032 = vrot.lane.b32.xlu0 %v1476, 28
  %v2033 = vpop.permute.xlu0 %2032
  %2034 = vrot.lane.b32.xlu0 %v1158, 28
  %v2035 = vpop.permute.xlu0 %2034
  %2036 = vrot.lane.b32.xlu0 %v1160, 28
  %v2037 = vpop.permute.xlu0 %2036
  %2038 = vrot.lane.b32.xlu0 %v1319, 28
  %v2039 = vpop.permute.xlu0 %2038
  %2040 = vrot.lane.b32.xlu0 %v1321, 28
  %v2041 = vpop.permute.xlu0 %2040
  %2042 = vrot.lane.b32.xlu0 %v1480, 28
  %v2043 = vpop.permute.xlu0 %2042
  %2044 = vrot.lane.b32.xlu0 %v1482, 28
  %v2045 = vpop.permute.xlu0 %2044
  %vm2046 = vcmask 228352
  %v2047 = vsel %vm2046, %v1855, %v1857
  %v2048 = vsel %vm2046, %v1857, %v1859
  %v2049 = vsel %vm2046, %v1859, %v1861
  %v2050 = vsel %vm2046, %v1861, %v1863
  %v2051 = vsel %vm2046, %v1863, %v1865
  %v2052 = vsel %vm2046, %v1867, %v1869
  %v2053 = vsel %vm2046, %v1869, %v1871
  %v2054 = vsel %vm2046, %v1871, %v1873
  %v2055 = vsel %vm2046, %v1873, %v1875
  %v2056 = vsel %vm2046, %v1875, %v1877
  %v2057 = vsel %vm2046, %v1879, %v1881
  %v2058 = vsel %vm2046, %v1881, %v1883
  %v2059 = vsel %vm2046, %v1883, %v1885
  %v2060 = vsel %vm2046, %v1885, %v1887
  %v2061 = vsel %vm2046, %v1887, %v1889
  %v2062 = vsel %vm2046, %v1891, %v1893
  %v2063 = vsel %vm2046, %v1893, %v1895
  %v2064 = vsel %vm2046, %v1895, %v1897
  %v2065 = vsel %vm2046, %v1897, %v1899
  %v2066 = vsel %vm2046, %v1899, %v1901
  %v2067 = vsel %vm2046, %v1903, %v1905
  %v2068 = vsel %vm2046, %v1905, %v1907
  %v2069 = vsel %vm2046, %v1907, %v1909
  %v2070 = vsel %vm2046, %v1909, %v1911
  %v2071 = vsel %vm2046, %v1911, %v1913
  %v2072 = vsel %vm2046, %v1915, %v1917
  %v2073 = vsel %vm2046, %v1917, %v1919
  %v2074 = vsel %vm2046, %v1919, %v1921
  %v2075 = vsel %vm2046, %v1921, %v1923
  %v2076 = vsel %vm2046, %v1923, %v1925
  %v2077 = vsel %vm2046, %v1927, %v1929
  %v2078 = vsel %vm2046, %v1929, %v1931
  %v2079 = vsel %vm2046, %v1931, %v1933
  %v2080 = vsel %vm2046, %v1933, %v1935
  %v2081 = vsel %vm2046, %v1935, %v1937
  %v2082 = vsel %vm2046, %v1939, %v1941
  %v2083 = vsel %vm2046, %v1941, %v1943
  %v2084 = vsel %vm2046, %v1943, %v1945
  %v2085 = vsel %vm2046, %v1945, %v1947
  %v2086 = vsel %vm2046, %v1947, %v1949
  %v2087 = vsel %vm2046, %v1951, %v1953
  %v2088 = vsel %vm2046, %v1953, %v1955
  %v2089 = vsel %vm2046, %v1955, %v1957
  %v2090 = vsel %vm2046, %v1957, %v1959
  %v2091 = vsel %vm2046, %v1959, %v1961
  %v2092 = vsel %vm2046, %v1963, %v1965
  %v2093 = vsel %vm2046, %v1965, %v1967
  %v2094 = vsel %vm2046, %v1967, %v1969
  %v2095 = vsel %vm2046, %v1969, %v1971
  %v2096 = vsel %vm2046, %v1971, %v1973
  %v2097 = vsel %vm2046, %v1975, %v1977
  %v2098 = vsel %vm2046, %v1977, %v1979
  %v2099 = vsel %vm2046, %v1979, %v1981
  %v2100 = vsel %vm2046, %v1981, %v1983
  %v2101 = vsel %vm2046, %v1983, %v1985
  %v2102 = vsel %vm2046, %v1987, %v1989
  %v2103 = vsel %vm2046, %v1989, %v1991
  %v2104 = vsel %vm2046, %v1991, %v1993
  %v2105 = vsel %vm2046, %v1993, %v1995
  %v2106 = vsel %vm2046, %v1995, %v1997
  %v2107 = vsel %vm2046, %v1999, %v2001
  %v2108 = vsel %vm2046, %v2001, %v2003
  %v2109 = vsel %vm2046, %v2003, %v2005
  %v2110 = vsel %vm2046, %v2005, %v2007
  %v2111 = vsel %vm2046, %v2007, %v2009
  %v2112 = vsel %vm2046, %v2011, %v2013
  %v2113 = vsel %vm2046, %v2013, %v2015
  %v2114 = vsel %vm2046, %v2015, %v2017
  %v2115 = vsel %vm2046, %v2017, %v2019
  %v2116 = vsel %vm2046, %v2019, %v2021
  %v2117 = vsel %vm2046, %v2023, %v2025
  %v2118 = vsel %vm2046, %v2025, %v2027
  %v2119 = vsel %vm2046, %v2027, %v2029
  %v2120 = vsel %vm2046, %v2029, %v2031
  %v2121 = vsel %vm2046, %v2031, %v2033
  %v2122 = vsel %vm2046, %v2035, %v2037
  %v2123 = vsel %vm2046, %v2037, %v2039
  %v2124 = vsel %vm2046, %v2039, %v2041
  %v2125 = vsel %vm2046, %v2041, %v2043
  %v2126 = vsel %vm2046, %v2043, %v2045
  %v2239 = vsel %vm2046, %v1742, %v1855
  %v2240 = vsel %vm2046, %v1743, %v1867
  %v2241 = vsel %vm2046, %v1744, %v1879
  %v2242 = vsel %vm2046, %v1745, %v1891
  %v2243 = vsel %vm2046, %v1746, %v1903
  %v2244 = vsel %vm2046, %v1747, %v1915
  %v2245 = vsel %vm2046, %v1748, %v1927
  %v2246 = vsel %vm2046, %v1749, %v1939
  %v2247 = vsel %vm2046, %v1750, %v1951
  %v2248 = vsel %vm2046, %v1751, %v1963
  %v2249 = vsel %vm2046, %v1752, %v1975
  %v2250 = vsel %vm2046, %v1753, %v1987
  %v2251 = vsel %vm2046, %v1754, %v1999
  %v2252 = vsel %vm2046, %v1755, %v2011
  %v2253 = vsel %vm2046, %v1756, %v2023
  %v2254 = vsel %vm2046, %v1757, %v2035
  %2256 = vset.pattern.permute.xlu0 0
  %2257 = vperm.xlu0 %2256, %v1629
  %v2258 = vpop.permute.xlu0 %2257
  %2261 = vset.pattern.permute.xlu0 0
  %2262 = vperm.xlu0 %2261, %v1630
  %v2263 = vpop.permute.xlu0 %2262
  %2266 = vset.pattern.permute.xlu0 0
  %2267 = vperm.xlu0 %2266, %v1631
  %v2268 = vpop.permute.xlu0 %2267
  %2271 = vset.pattern.permute.xlu0 0
  %2272 = vperm.xlu0 %2271, %v1632
  %v2273 = vpop.permute.xlu0 %2272
  %2276 = vset.pattern.permute.xlu0 0
  %2277 = vperm.xlu0 %2276, %v1633
  %v2278 = vpop.permute.xlu0 %2277
  %2281 = vset.pattern.permute.xlu0 0
  %2282 = vperm.xlu0 %2281, %v1634
  %v2283 = vpop.permute.xlu0 %2282
  %2286 = vset.pattern.permute.xlu0 0
  %2287 = vperm.xlu0 %2286, %v1635
  %v2288 = vpop.permute.xlu0 %2287
  %2291 = vset.pattern.permute.xlu0 0
  %2292 = vperm.xlu0 %2291, %v1636
  %v2293 = vpop.permute.xlu0 %2292
  %2296 = vset.pattern.permute.xlu0 0
  %2297 = vperm.xlu0 %2296, %v1637
  %v2298 = vpop.permute.xlu0 %2297
  %2301 = vset.pattern.permute.xlu0 0
  %2302 = vperm.xlu0 %2301, %v1638
  %v2303 = vpop.permute.xlu0 %2302
  %2306 = vset.pattern.permute.xlu0 0
  %2307 = vperm.xlu0 %2306, %v1639
  %v2308 = vpop.permute.xlu0 %2307
  %2311 = vset.pattern.permute.xlu0 0
  %2312 = vperm.xlu0 %2311, %v1640
  %v2313 = vpop.permute.xlu0 %2312
  %2316 = vset.pattern.permute.xlu0 0
  %2317 = vperm.xlu0 %2316, %v1641
  %v2318 = vpop.permute.xlu0 %2317
  %2321 = vset.pattern.permute.xlu0 0
  %2322 = vperm.xlu0 %2321, %v1642
  %v2323 = vpop.permute.xlu0 %2322
  %2326 = vset.pattern.permute.xlu0 0
  %2327 = vperm.xlu0 %2326, %v1643
  %v2328 = vpop.permute.xlu0 %2327
  %2331 = vset.pattern.permute.xlu0 0
  %2332 = vperm.xlu0 %2331, %v1644
  %v2333 = vpop.permute.xlu0 %2332
  %v2335 = vmul.f32 %v2258, %v2239
  %v2336 = vmul.f32 %v2258, %v2047
  %v2337 = vmul.f32 %v2258, %v2048
  %v2338 = vmul.f32 %v2258, %v2049
  %v2339 = vmul.f32 %v2258, %v2050
  %v2340 = vmul.f32 %v2258, %v2051
  %v2341 = vmul.f32 %v2258, %v1865
  %v2342 = vmul.f32 %v2263, %v2240
  %v2343 = vmul.f32 %v2263, %v2052
  %v2344 = vmul.f32 %v2263, %v2053
  %v2345 = vmul.f32 %v2263, %v2054
  %v2346 = vmul.f32 %v2263, %v2055
  %v2347 = vmul.f32 %v2263, %v2056
  %v2348 = vmul.f32 %v2263, %v1877
  %v2349 = vmul.f32 %v2268, %v2241
  %v2350 = vmul.f32 %v2268, %v2057
  %v2351 = vmul.f32 %v2268, %v2058
  %v2352 = vmul.f32 %v2268, %v2059
  %v2353 = vmul.f32 %v2268, %v2060
  %v2354 = vmul.f32 %v2268, %v2061
  %v2355 = vmul.f32 %v2268, %v1889
  %v2356 = vmul.f32 %v2273, %v2242
  %v2357 = vmul.f32 %v2273, %v2062
  %v2358 = vmul.f32 %v2273, %v2063
  %v2359 = vmul.f32 %v2273, %v2064
  %v2360 = vmul.f32 %v2273, %v2065
  %v2361 = vmul.f32 %v2273, %v2066
  %v2362 = vmul.f32 %v2273, %v1901
  %v2363 = vmul.f32 %v2278, %v2243
  %v2364 = vmul.f32 %v2278, %v2067
  %v2365 = vmul.f32 %v2278, %v2068
  %v2366 = vmul.f32 %v2278, %v2069
  %v2367 = vmul.f32 %v2278, %v2070
  %v2368 = vmul.f32 %v2278, %v2071
  %v2369 = vmul.f32 %v2278, %v1913
  %v2370 = vmul.f32 %v2283, %v2244
  %v2371 = vmul.f32 %v2283, %v2072
  %v2372 = vmul.f32 %v2283, %v2073
  %v2373 = vmul.f32 %v2283, %v2074
  %v2374 = vmul.f32 %v2283, %v2075
  %v2375 = vmul.f32 %v2283, %v2076
  %v2376 = vmul.f32 %v2283, %v1925
  %v2377 = vmul.f32 %v2288, %v2245
  %v2378 = vmul.f32 %v2288, %v2077
  %v2379 = vmul.f32 %v2288, %v2078
  %v2380 = vmul.f32 %v2288, %v2079
  %v2381 = vmul.f32 %v2288, %v2080
  %v2382 = vmul.f32 %v2288, %v2081
  %v2383 = vmul.f32 %v2288, %v1937
  %v2384 = vmul.f32 %v2293, %v2246
  %v2385 = vmul.f32 %v2293, %v2082
  %v2386 = vmul.f32 %v2293, %v2083
  %v2387 = vmul.f32 %v2293, %v2084
  %v2388 = vmul.f32 %v2293, %v2085
  %v2389 = vmul.f32 %v2293, %v2086
  %v2390 = vmul.f32 %v2293, %v1949
  %v2391 = vmul.f32 %v2298, %v2247
  %v2392 = vmul.f32 %v2298, %v2087
  %v2393 = vmul.f32 %v2298, %v2088
  %v2394 = vmul.f32 %v2298, %v2089
  %v2395 = vmul.f32 %v2298, %v2090
  %v2396 = vmul.f32 %v2298, %v2091
  %v2397 = vmul.f32 %v2298, %v1961
  %v2398 = vmul.f32 %v2303, %v2248
  %v2399 = vmul.f32 %v2303, %v2092
  %v2400 = vmul.f32 %v2303, %v2093
  %v2401 = vmul.f32 %v2303, %v2094
  %v2402 = vmul.f32 %v2303, %v2095
  %v2403 = vmul.f32 %v2303, %v2096
  %v2404 = vmul.f32 %v2303, %v1973
  %v2405 = vmul.f32 %v2308, %v2249
  %v2406 = vmul.f32 %v2308, %v2097
  %v2407 = vmul.f32 %v2308, %v2098
  %v2408 = vmul.f32 %v2308, %v2099
  %v2409 = vmul.f32 %v2308, %v2100
  %v2410 = vmul.f32 %v2308, %v2101
  %v2411 = vmul.f32 %v2308, %v1985
  %v2412 = vmul.f32 %v2313, %v2250
  %v2413 = vmul.f32 %v2313, %v2102
  %v2414 = vmul.f32 %v2313, %v2103
  %v2415 = vmul.f32 %v2313, %v2104
  %v2416 = vmul.f32 %v2313, %v2105
  %v2417 = vmul.f32 %v2313, %v2106
  %v2418 = vmul.f32 %v2313, %v1997
  %v2419 = vmul.f32 %v2318, %v2251
  %v2420 = vmul.f32 %v2318, %v2107
  %v2421 = vmul.f32 %v2318, %v2108
  %v2422 = vmul.f32 %v2318, %v2109
  %v2423 = vmul.f32 %v2318, %v2110
  %v2424 = vmul.f32 %v2318, %v2111
  %v2425 = vmul.f32 %v2318, %v2009
  %v2426 = vmul.f32 %v2323, %v2252
  %v2427 = vmul.f32 %v2323, %v2112
  %v2428 = vmul.f32 %v2323, %v2113
  %v2429 = vmul.f32 %v2323, %v2114
  %v2430 = vmul.f32 %v2323, %v2115
  %v2431 = vmul.f32 %v2323, %v2116
  %v2432 = vmul.f32 %v2323, %v2021
  %v2433 = vmul.f32 %v2328, %v2253
  %v2434 = vmul.f32 %v2328, %v2117
  %v2435 = vmul.f32 %v2328, %v2118
  %v2436 = vmul.f32 %v2328, %v2119
  %v2437 = vmul.f32 %v2328, %v2120
  %v2438 = vmul.f32 %v2328, %v2121
  %v2439 = vmul.f32 %v2328, %v2033
  %v2440 = vmul.f32 %v2333, %v2254
  %v2441 = vmul.f32 %v2333, %v2122
  %v2442 = vmul.f32 %v2333, %v2123
  %v2443 = vmul.f32 %v2333, %v2124
  %v2444 = vmul.f32 %v2333, %v2125
  %v2445 = vmul.f32 %v2333, %v2126
  %v2446 = vmul.f32 %v2333, %v2045
  %2447 = vrot.lane.b32.xlu0 %v1392, 40
  %v2448 = vpop.permute.xlu0 %2447
  %2449 = vrot.lane.b32.xlu0 %v1551, 40
  %v2450 = vpop.permute.xlu0 %2449
  %2451 = vrot.lane.b32.xlu0 %v1398, 40
  %v2452 = vpop.permute.xlu0 %2451
  %2453 = vrot.lane.b32.xlu0 %v1556, 40
  %v2454 = vpop.permute.xlu0 %2453
  %2455 = vrot.lane.b32.xlu0 %v1404, 40
  %v2456 = vpop.permute.xlu0 %2455
  %2457 = vrot.lane.b32.xlu0 %v1561, 40
  %v2458 = vpop.permute.xlu0 %2457
  %2459 = vrot.lane.b32.xlu0 %v1410, 40
  %v2460 = vpop.permute.xlu0 %2459
  %2461 = vrot.lane.b32.xlu0 %v1566, 40
  %v2462 = vpop.permute.xlu0 %2461
  %2463 = vrot.lane.b32.xlu0 %v1416, 40
  %v2464 = vpop.permute.xlu0 %2463
  %2465 = vrot.lane.b32.xlu0 %v1571, 40
  %v2466 = vpop.permute.xlu0 %2465
  %2467 = vrot.lane.b32.xlu0 %v1422, 40
  %v2468 = vpop.permute.xlu0 %2467
  %2469 = vrot.lane.b32.xlu0 %v1576, 40
  %v2470 = vpop.permute.xlu0 %2469
  %2471 = vrot.lane.b32.xlu0 %v1428, 40
  %v2472 = vpop.permute.xlu0 %2471
  %2473 = vrot.lane.b32.xlu0 %v1581, 40
  %v2474 = vpop.permute.xlu0 %2473
  %2475 = vrot.lane.b32.xlu0 %v1434, 40
  %v2476 = vpop.permute.xlu0 %2475
  %2477 = vrot.lane.b32.xlu0 %v1586, 40
  %v2478 = vpop.permute.xlu0 %2477
  %2479 = vrot.lane.b32.xlu0 %v1440, 40
  %v2480 = vpop.permute.xlu0 %2479
  %2481 = vrot.lane.b32.xlu0 %v1591, 40
  %v2482 = vpop.permute.xlu0 %2481
  %2483 = vrot.lane.b32.xlu0 %v1446, 40
  %v2484 = vpop.permute.xlu0 %2483
  %2485 = vrot.lane.b32.xlu0 %v1596, 40
  %v2486 = vpop.permute.xlu0 %2485
  %2487 = vrot.lane.b32.xlu0 %v1452, 40
  %v2488 = vpop.permute.xlu0 %2487
  %2489 = vrot.lane.b32.xlu0 %v1601, 40
  %v2490 = vpop.permute.xlu0 %2489
  %2491 = vrot.lane.b32.xlu0 %v1458, 40
  %v2492 = vpop.permute.xlu0 %2491
  %2493 = vrot.lane.b32.xlu0 %v1606, 40
  %v2494 = vpop.permute.xlu0 %2493
  %2495 = vrot.lane.b32.xlu0 %v1464, 40
  %v2496 = vpop.permute.xlu0 %2495
  %2497 = vrot.lane.b32.xlu0 %v1611, 40
  %v2498 = vpop.permute.xlu0 %2497
  %2499 = vrot.lane.b32.xlu0 %v1470, 40
  %v2500 = vpop.permute.xlu0 %2499
  %2501 = vrot.lane.b32.xlu0 %v1616, 40
  %v2502 = vpop.permute.xlu0 %2501
  %2503 = vrot.lane.b32.xlu0 %v1476, 40
  %v2504 = vpop.permute.xlu0 %2503
  %2505 = vrot.lane.b32.xlu0 %v1621, 40
  %v2506 = vpop.permute.xlu0 %2505
  %2507 = vrot.lane.b32.xlu0 %v1482, 40
  %v2508 = vpop.permute.xlu0 %2507
  %2509 = vrot.lane.b32.xlu0 %v1626, 40
  %v2510 = vpop.permute.xlu0 %2509
  %vm2511 = vcmask 326656
  %v2512 = vsel %vm2511, %v2448, %v2450
  %v2513 = vsel %vm2511, %v2452, %v2454
  %v2514 = vsel %vm2511, %v2456, %v2458
  %v2515 = vsel %vm2511, %v2460, %v2462
  %v2516 = vsel %vm2511, %v2464, %v2466
  %v2517 = vsel %vm2511, %v2468, %v2470
  %v2518 = vsel %vm2511, %v2472, %v2474
  %v2519 = vsel %vm2511, %v2476, %v2478
  %v2520 = vsel %vm2511, %v2480, %v2482
  %v2521 = vsel %vm2511, %v2484, %v2486
  %v2522 = vsel %vm2511, %v2488, %v2490
  %v2523 = vsel %vm2511, %v2492, %v2494
  %v2524 = vsel %vm2511, %v2496, %v2498
  %v2525 = vsel %vm2511, %v2500, %v2502
  %v2526 = vsel %vm2511, %v2504, %v2506
  %v2527 = vsel %vm2511, %v2508, %v2510
  %2544 = vrot.lane.b32.xlu0 %v1068, 56
  %v2545 = vpop.permute.xlu0 %2544
  %2546 = vrot.lane.b32.xlu0 %v1070, 56
  %v2547 = vpop.permute.xlu0 %2546
  %2548 = vrot.lane.b32.xlu0 %v1229, 56
  %v2549 = vpop.permute.xlu0 %2548
  %2550 = vrot.lane.b32.xlu0 %v1231, 56
  %v2551 = vpop.permute.xlu0 %2550
  %2552 = vrot.lane.b32.xlu0 %v1390, 56
  %v2553 = vpop.permute.xlu0 %2552
  %2554 = vrot.lane.b32.xlu0 %v1392, 56
  %v2555 = vpop.permute.xlu0 %2554
  %2556 = vrot.lane.b32.xlu0 %v1074, 56
  %v2557 = vpop.permute.xlu0 %2556
  %2558 = vrot.lane.b32.xlu0 %v1076, 56
  %v2559 = vpop.permute.xlu0 %2558
  %2560 = vrot.lane.b32.xlu0 %v1235, 56
  %v2561 = vpop.permute.xlu0 %2560
  %2562 = vrot.lane.b32.xlu0 %v1237, 56
  %v2563 = vpop.permute.xlu0 %2562
  %2564 = vrot.lane.b32.xlu0 %v1396, 56
  %v2565 = vpop.permute.xlu0 %2564
  %2566 = vrot.lane.b32.xlu0 %v1398, 56
  %v2567 = vpop.permute.xlu0 %2566
  %2568 = vrot.lane.b32.xlu0 %v1080, 56
  %v2569 = vpop.permute.xlu0 %2568
  %2570 = vrot.lane.b32.xlu0 %v1082, 56
  %v2571 = vpop.permute.xlu0 %2570
  %2572 = vrot.lane.b32.xlu0 %v1241, 56
  %v2573 = vpop.permute.xlu0 %2572
  %2574 = vrot.lane.b32.xlu0 %v1243, 56
  %v2575 = vpop.permute.xlu0 %2574
  %2576 = vrot.lane.b32.xlu0 %v1402, 56
  %v2577 = vpop.permute.xlu0 %2576
  %2578 = vrot.lane.b32.xlu0 %v1404, 56
  %v2579 = vpop.permute.xlu0 %2578
  %2580 = vrot.lane.b32.xlu0 %v1086, 56
  %v2581 = vpop.permute.xlu0 %2580
  %2582 = vrot.lane.b32.xlu0 %v1088, 56
  %v2583 = vpop.permute.xlu0 %2582
  %2584 = vrot.lane.b32.xlu0 %v1247, 56
  %v2585 = vpop.permute.xlu0 %2584
  %2586 = vrot.lane.b32.xlu0 %v1249, 56
  %v2587 = vpop.permute.xlu0 %2586
  %2588 = vrot.lane.b32.xlu0 %v1408, 56
  %v2589 = vpop.permute.xlu0 %2588
  %2590 = vrot.lane.b32.xlu0 %v1410, 56
  %v2591 = vpop.permute.xlu0 %2590
  %2592 = vrot.lane.b32.xlu0 %v1092, 56
  %v2593 = vpop.permute.xlu0 %2592
  %2594 = vrot.lane.b32.xlu0 %v1094, 56
  %v2595 = vpop.permute.xlu0 %2594
  %2596 = vrot.lane.b32.xlu0 %v1253, 56
  %v2597 = vpop.permute.xlu0 %2596
  %2598 = vrot.lane.b32.xlu0 %v1255, 56
  %v2599 = vpop.permute.xlu0 %2598
  %2600 = vrot.lane.b32.xlu0 %v1414, 56
  %v2601 = vpop.permute.xlu0 %2600
  %2602 = vrot.lane.b32.xlu0 %v1416, 56
  %v2603 = vpop.permute.xlu0 %2602
  %2604 = vrot.lane.b32.xlu0 %v1098, 56
  %v2605 = vpop.permute.xlu0 %2604
  %2606 = vrot.lane.b32.xlu0 %v1100, 56
  %v2607 = vpop.permute.xlu0 %2606
  %2608 = vrot.lane.b32.xlu0 %v1259, 56
  %v2609 = vpop.permute.xlu0 %2608
  %2610 = vrot.lane.b32.xlu0 %v1261, 56
  %v2611 = vpop.permute.xlu0 %2610
  %2612 = vrot.lane.b32.xlu0 %v1420, 56
  %v2613 = vpop.permute.xlu0 %2612
  %2614 = vrot.lane.b32.xlu0 %v1422, 56
  %v2615 = vpop.permute.xlu0 %2614
  %2616 = vrot.lane.b32.xlu0 %v1104, 56
  %v2617 = vpop.permute.xlu0 %2616
  %2618 = vrot.lane.b32.xlu0 %v1106, 56
  %v2619 = vpop.permute.xlu0 %2618
  %2620 = vrot.lane.b32.xlu0 %v1265, 56
  %v2621 = vpop.permute.xlu0 %2620
  %2622 = vrot.lane.b32.xlu0 %v1267, 56
  %v2623 = vpop.permute.xlu0 %2622
  %2624 = vrot.lane.b32.xlu0 %v1426, 56
  %v2625 = vpop.permute.xlu0 %2624
  %2626 = vrot.lane.b32.xlu0 %v1428, 56
  %v2627 = vpop.permute.xlu0 %2626
  %2628 = vrot.lane.b32.xlu0 %v1110, 56
  %v2629 = vpop.permute.xlu0 %2628
  %2630 = vrot.lane.b32.xlu0 %v1112, 56
  %v2631 = vpop.permute.xlu0 %2630
  %2632 = vrot.lane.b32.xlu0 %v1271, 56
  %v2633 = vpop.permute.xlu0 %2632
  %2634 = vrot.lane.b32.xlu0 %v1273, 56
  %v2635 = vpop.permute.xlu0 %2634
  %2636 = vrot.lane.b32.xlu0 %v1432, 56
  %v2637 = vpop.permute.xlu0 %2636
  %2638 = vrot.lane.b32.xlu0 %v1434, 56
  %v2639 = vpop.permute.xlu0 %2638
  %2640 = vrot.lane.b32.xlu0 %v1116, 56
  %v2641 = vpop.permute.xlu0 %2640
  %2642 = vrot.lane.b32.xlu0 %v1118, 56
  %v2643 = vpop.permute.xlu0 %2642
  %2644 = vrot.lane.b32.xlu0 %v1277, 56
  %v2645 = vpop.permute.xlu0 %2644
  %2646 = vrot.lane.b32.xlu0 %v1279, 56
  %v2647 = vpop.permute.xlu0 %2646
  %2648 = vrot.lane.b32.xlu0 %v1438, 56
  %v2649 = vpop.permute.xlu0 %2648
  %2650 = vrot.lane.b32.xlu0 %v1440, 56
  %v2651 = vpop.permute.xlu0 %2650
  %2652 = vrot.lane.b32.xlu0 %v1122, 56
  %v2653 = vpop.permute.xlu0 %2652
  %2654 = vrot.lane.b32.xlu0 %v1124, 56
  %v2655 = vpop.permute.xlu0 %2654
  %2656 = vrot.lane.b32.xlu0 %v1283, 56
  %v2657 = vpop.permute.xlu0 %2656
  %2658 = vrot.lane.b32.xlu0 %v1285, 56
  %v2659 = vpop.permute.xlu0 %2658
  %2660 = vrot.lane.b32.xlu0 %v1444, 56
  %v2661 = vpop.permute.xlu0 %2660
  %2662 = vrot.lane.b32.xlu0 %v1446, 56
  %v2663 = vpop.permute.xlu0 %2662
  %2664 = vrot.lane.b32.xlu0 %v1128, 56
  %v2665 = vpop.permute.xlu0 %2664
  %2666 = vrot.lane.b32.xlu0 %v1130, 56
  %v2667 = vpop.permute.xlu0 %2666
  %2668 = vrot.lane.b32.xlu0 %v1289, 56
  %v2669 = vpop.permute.xlu0 %2668
  %2670 = vrot.lane.b32.xlu0 %v1291, 56
  %v2671 = vpop.permute.xlu0 %2670
  %2672 = vrot.lane.b32.xlu0 %v1450, 56
  %v2673 = vpop.permute.xlu0 %2672
  %2674 = vrot.lane.b32.xlu0 %v1452, 56
  %v2675 = vpop.permute.xlu0 %2674
  %2676 = vrot.lane.b32.xlu0 %v1134, 56
  %v2677 = vpop.permute.xlu0 %2676
  %2678 = vrot.lane.b32.xlu0 %v1136, 56
  %v2679 = vpop.permute.xlu0 %2678
  %2680 = vrot.lane.b32.xlu0 %v1295, 56
  %v2681 = vpop.permute.xlu0 %2680
  %2682 = vrot.lane.b32.xlu0 %v1297, 56
  %v2683 = vpop.permute.xlu0 %2682
  %2684 = vrot.lane.b32.xlu0 %v1456, 56
  %v2685 = vpop.permute.xlu0 %2684
  %2686 = vrot.lane.b32.xlu0 %v1458, 56
  %v2687 = vpop.permute.xlu0 %2686
  %2688 = vrot.lane.b32.xlu0 %v1140, 56
  %v2689 = vpop.permute.xlu0 %2688
  %2690 = vrot.lane.b32.xlu0 %v1142, 56
  %v2691 = vpop.permute.xlu0 %2690
  %2692 = vrot.lane.b32.xlu0 %v1301, 56
  %v2693 = vpop.permute.xlu0 %2692
  %2694 = vrot.lane.b32.xlu0 %v1303, 56
  %v2695 = vpop.permute.xlu0 %2694
  %2696 = vrot.lane.b32.xlu0 %v1462, 56
  %v2697 = vpop.permute.xlu0 %2696
  %2698 = vrot.lane.b32.xlu0 %v1464, 56
  %v2699 = vpop.permute.xlu0 %2698
  %2700 = vrot.lane.b32.xlu0 %v1146, 56
  %v2701 = vpop.permute.xlu0 %2700
  %2702 = vrot.lane.b32.xlu0 %v1148, 56
  %v2703 = vpop.permute.xlu0 %2702
  %2704 = vrot.lane.b32.xlu0 %v1307, 56
  %v2705 = vpop.permute.xlu0 %2704
  %2706 = vrot.lane.b32.xlu0 %v1309, 56
  %v2707 = vpop.permute.xlu0 %2706
  %2708 = vrot.lane.b32.xlu0 %v1468, 56
  %v2709 = vpop.permute.xlu0 %2708
  %2710 = vrot.lane.b32.xlu0 %v1470, 56
  %v2711 = vpop.permute.xlu0 %2710
  %2712 = vrot.lane.b32.xlu0 %v1152, 56
  %v2713 = vpop.permute.xlu0 %2712
  %2714 = vrot.lane.b32.xlu0 %v1154, 56
  %v2715 = vpop.permute.xlu0 %2714
  %2716 = vrot.lane.b32.xlu0 %v1313, 56
  %v2717 = vpop.permute.xlu0 %2716
  %2718 = vrot.lane.b32.xlu0 %v1315, 56
  %v2719 = vpop.permute.xlu0 %2718
  %2720 = vrot.lane.b32.xlu0 %v1474, 56
  %v2721 = vpop.permute.xlu0 %2720
  %2722 = vrot.lane.b32.xlu0 %v1476, 56
  %v2723 = vpop.permute.xlu0 %2722
  %2724 = vrot.lane.b32.xlu0 %v1158, 56
  %v2725 = vpop.permute.xlu0 %2724
  %2726 = vrot.lane.b32.xlu0 %v1160, 56
  %v2727 = vpop.permute.xlu0 %2726
  %2728 = vrot.lane.b32.xlu0 %v1319, 56
  %v2729 = vpop.permute.xlu0 %2728
  %2730 = vrot.lane.b32.xlu0 %v1321, 56
  %v2731 = vpop.permute.xlu0 %2730
  %2732 = vrot.lane.b32.xlu0 %v1480, 56
  %v2733 = vpop.permute.xlu0 %2732
  %2734 = vrot.lane.b32.xlu0 %v1482, 56
  %v2735 = vpop.permute.xlu0 %2734
  %vm2736 = vcmask 457728
  %v2737 = vsel %vm2736, %v2545, %v2547
  %v2738 = vsel %vm2736, %v2547, %v2549
  %v2739 = vsel %vm2736, %v2549, %v2551
  %v2740 = vsel %vm2736, %v2551, %v2553
  %v2741 = vsel %vm2736, %v2553, %v2555
  %v2742 = vsel %vm2736, %v2557, %v2559
  %v2743 = vsel %vm2736, %v2559, %v2561
  %v2744 = vsel %vm2736, %v2561, %v2563
  %v2745 = vsel %vm2736, %v2563, %v2565
  %v2746 = vsel %vm2736, %v2565, %v2567
  %v2747 = vsel %vm2736, %v2569, %v2571
  %v2748 = vsel %vm2736, %v2571, %v2573
  %v2749 = vsel %vm2736, %v2573, %v2575
  %v2750 = vsel %vm2736, %v2575, %v2577
  %v2751 = vsel %vm2736, %v2577, %v2579
  %v2752 = vsel %vm2736, %v2581, %v2583
  %v2753 = vsel %vm2736, %v2583, %v2585
  %v2754 = vsel %vm2736, %v2585, %v2587
  %v2755 = vsel %vm2736, %v2587, %v2589
  %v2756 = vsel %vm2736, %v2589, %v2591
  %v2757 = vsel %vm2736, %v2593, %v2595
  %v2758 = vsel %vm2736, %v2595, %v2597
  %v2759 = vsel %vm2736, %v2597, %v2599
  %v2760 = vsel %vm2736, %v2599, %v2601
  %v2761 = vsel %vm2736, %v2601, %v2603
  %v2762 = vsel %vm2736, %v2605, %v2607
  %v2763 = vsel %vm2736, %v2607, %v2609
  %v2764 = vsel %vm2736, %v2609, %v2611
  %v2765 = vsel %vm2736, %v2611, %v2613
  %v2766 = vsel %vm2736, %v2613, %v2615
  %v2767 = vsel %vm2736, %v2617, %v2619
  %v2768 = vsel %vm2736, %v2619, %v2621
  %v2769 = vsel %vm2736, %v2621, %v2623
  %v2770 = vsel %vm2736, %v2623, %v2625
  %v2771 = vsel %vm2736, %v2625, %v2627
  %v2772 = vsel %vm2736, %v2629, %v2631
  %v2773 = vsel %vm2736, %v2631, %v2633
  %v2774 = vsel %vm2736, %v2633, %v2635
  %v2775 = vsel %vm2736, %v2635, %v2637
  %v2776 = vsel %vm2736, %v2637, %v2639
  %v2777 = vsel %vm2736, %v2641, %v2643
  %v2778 = vsel %vm2736, %v2643, %v2645
  %v2779 = vsel %vm2736, %v2645, %v2647
  %v2780 = vsel %vm2736, %v2647, %v2649
  %v2781 = vsel %vm2736, %v2649, %v2651
  %v2782 = vsel %vm2736, %v2653, %v2655
  %v2783 = vsel %vm2736, %v2655, %v2657
  %v2784 = vsel %vm2736, %v2657, %v2659
  %v2785 = vsel %vm2736, %v2659, %v2661
  %v2786 = vsel %vm2736, %v2661, %v2663
  %v2787 = vsel %vm2736, %v2665, %v2667
  %v2788 = vsel %vm2736, %v2667, %v2669
  %v2789 = vsel %vm2736, %v2669, %v2671
  %v2790 = vsel %vm2736, %v2671, %v2673
  %v2791 = vsel %vm2736, %v2673, %v2675
  %v2792 = vsel %vm2736, %v2677, %v2679
  %v2793 = vsel %vm2736, %v2679, %v2681
  %v2794 = vsel %vm2736, %v2681, %v2683
  %v2795 = vsel %vm2736, %v2683, %v2685
  %v2796 = vsel %vm2736, %v2685, %v2687
  %v2797 = vsel %vm2736, %v2689, %v2691
  %v2798 = vsel %vm2736, %v2691, %v2693
  %v2799 = vsel %vm2736, %v2693, %v2695
  %v2800 = vsel %vm2736, %v2695, %v2697
  %v2801 = vsel %vm2736, %v2697, %v2699
  %v2802 = vsel %vm2736, %v2701, %v2703
  %v2803 = vsel %vm2736, %v2703, %v2705
  %v2804 = vsel %vm2736, %v2705, %v2707
  %v2805 = vsel %vm2736, %v2707, %v2709
  %v2806 = vsel %vm2736, %v2709, %v2711
  %v2807 = vsel %vm2736, %v2713, %v2715
  %v2808 = vsel %vm2736, %v2715, %v2717
  %v2809 = vsel %vm2736, %v2717, %v2719
  %v2810 = vsel %vm2736, %v2719, %v2721
  %v2811 = vsel %vm2736, %v2721, %v2723
  %v2812 = vsel %vm2736, %v2725, %v2727
  %v2813 = vsel %vm2736, %v2727, %v2729
  %v2814 = vsel %vm2736, %v2729, %v2731
  %v2815 = vsel %vm2736, %v2731, %v2733
  %v2816 = vsel %vm2736, %v2733, %v2735
  %v2929 = vsel %vm2736, %v2512, %v2545
  %v2930 = vsel %vm2736, %v2513, %v2557
  %v2931 = vsel %vm2736, %v2514, %v2569
  %v2932 = vsel %vm2736, %v2515, %v2581
  %v2933 = vsel %vm2736, %v2516, %v2593
  %v2934 = vsel %vm2736, %v2517, %v2605
  %v2935 = vsel %vm2736, %v2518, %v2617
  %v2936 = vsel %vm2736, %v2519, %v2629
  %v2937 = vsel %vm2736, %v2520, %v2641
  %v2938 = vsel %vm2736, %v2521, %v2653
  %v2939 = vsel %vm2736, %v2522, %v2665
  %v2940 = vsel %vm2736, %v2523, %v2677
  %v2941 = vsel %vm2736, %v2524, %v2689
  %v2942 = vsel %vm2736, %v2525, %v2701
  %v2943 = vsel %vm2736, %v2526, %v2713
  %v2944 = vsel %vm2736, %v2527, %v2725
  %2945 = vset.pattern.permute.xlu0 1
  %2946 = vperm.xlu0 %2945, %v1629
  %v2947 = vpop.permute.xlu0 %2946
  %2949 = vset.pattern.permute.xlu0 1
  %2950 = vperm.xlu0 %2949, %v1630
  %v2951 = vpop.permute.xlu0 %2950
  %2953 = vset.pattern.permute.xlu0 1
  %2954 = vperm.xlu0 %2953, %v1631
  %v2955 = vpop.permute.xlu0 %2954
  %2957 = vset.pattern.permute.xlu0 1
  %2958 = vperm.xlu0 %2957, %v1632
  %v2959 = vpop.permute.xlu0 %2958
  %2961 = vset.pattern.permute.xlu0 1
  %2962 = vperm.xlu0 %2961, %v1633
  %v2963 = vpop.permute.xlu0 %2962
  %2965 = vset.pattern.permute.xlu0 1
  %2966 = vperm.xlu0 %2965, %v1634
  %v2967 = vpop.permute.xlu0 %2966
  %2969 = vset.pattern.permute.xlu0 1
  %2970 = vperm.xlu0 %2969, %v1635
  %v2971 = vpop.permute.xlu0 %2970
  %2973 = vset.pattern.permute.xlu0 1
  %2974 = vperm.xlu0 %2973, %v1636
  %v2975 = vpop.permute.xlu0 %2974
  %2977 = vset.pattern.permute.xlu0 1
  %2978 = vperm.xlu0 %2977, %v1637
  %v2979 = vpop.permute.xlu0 %2978
  %2981 = vset.pattern.permute.xlu0 1
  %2982 = vperm.xlu0 %2981, %v1638
  %v2983 = vpop.permute.xlu0 %2982
  %2985 = vset.pattern.permute.xlu0 1
  %2986 = vperm.xlu0 %2985, %v1639
  %v2987 = vpop.permute.xlu0 %2986
  %2989 = vset.pattern.permute.xlu0 1
  %2990 = vperm.xlu0 %2989, %v1640
  %v2991 = vpop.permute.xlu0 %2990
  %2993 = vset.pattern.permute.xlu0 1
  %2994 = vperm.xlu0 %2993, %v1641
  %v2995 = vpop.permute.xlu0 %2994
  %2997 = vset.pattern.permute.xlu0 1
  %2998 = vperm.xlu0 %2997, %v1642
  %v2999 = vpop.permute.xlu0 %2998
  %3001 = vset.pattern.permute.xlu0 1
  %3002 = vperm.xlu0 %3001, %v1643
  %v3003 = vpop.permute.xlu0 %3002
  %3005 = vset.pattern.permute.xlu0 1
  %3006 = vperm.xlu0 %3005, %v1644
  %v3007 = vpop.permute.xlu0 %3006
  %v3009 = vmul.f32 %v2947, %v2929
  %v3010 = vmul.f32 %v2947, %v2737
  %v3011 = vmul.f32 %v2947, %v2738
  %v3012 = vmul.f32 %v2947, %v2739
  %v3013 = vmul.f32 %v2947, %v2740
  %v3014 = vmul.f32 %v2947, %v2741
  %v3015 = vmul.f32 %v2947, %v2555
  %v3016 = vmul.f32 %v2951, %v2930
  %v3017 = vmul.f32 %v2951, %v2742
  %v3018 = vmul.f32 %v2951, %v2743
  %v3019 = vmul.f32 %v2951, %v2744
  %v3020 = vmul.f32 %v2951, %v2745
  %v3021 = vmul.f32 %v2951, %v2746
  %v3022 = vmul.f32 %v2951, %v2567
  %v3023 = vmul.f32 %v2955, %v2931
  %v3024 = vmul.f32 %v2955, %v2747
  %v3025 = vmul.f32 %v2955, %v2748
  %v3026 = vmul.f32 %v2955, %v2749
  %v3027 = vmul.f32 %v2955, %v2750
  %v3028 = vmul.f32 %v2955, %v2751
  %v3029 = vmul.f32 %v2955, %v2579
  %v3030 = vmul.f32 %v2959, %v2932
  %v3031 = vmul.f32 %v2959, %v2752
  %v3032 = vmul.f32 %v2959, %v2753
  %v3033 = vmul.f32 %v2959, %v2754
  %v3034 = vmul.f32 %v2959, %v2755
  %v3035 = vmul.f32 %v2959, %v2756
  %v3036 = vmul.f32 %v2959, %v2591
  %v3037 = vmul.f32 %v2963, %v2933
  %v3038 = vmul.f32 %v2963, %v2757
  %v3039 = vmul.f32 %v2963, %v2758
  %v3040 = vmul.f32 %v2963, %v2759
  %v3041 = vmul.f32 %v2963, %v2760
  %v3042 = vmul.f32 %v2963, %v2761
  %v3043 = vmul.f32 %v2963, %v2603
  %v3044 = vmul.f32 %v2967, %v2934
  %v3045 = vmul.f32 %v2967, %v2762
  %v3046 = vmul.f32 %v2967, %v2763
  %v3047 = vmul.f32 %v2967, %v2764
  %v3048 = vmul.f32 %v2967, %v2765
  %v3049 = vmul.f32 %v2967, %v2766
  %v3050 = vmul.f32 %v2967, %v2615
  %v3051 = vmul.f32 %v2971, %v2935
  %v3052 = vmul.f32 %v2971, %v2767
  %v3053 = vmul.f32 %v2971, %v2768
  %v3054 = vmul.f32 %v2971, %v2769
  %v3055 = vmul.f32 %v2971, %v2770
  %v3056 = vmul.f32 %v2971, %v2771
  %v3057 = vmul.f32 %v2971, %v2627
  %v3058 = vmul.f32 %v2975, %v2936
  %v3059 = vmul.f32 %v2975, %v2772
  %v3060 = vmul.f32 %v2975, %v2773
  %v3061 = vmul.f32 %v2975, %v2774
  %v3062 = vmul.f32 %v2975, %v2775
  %v3063 = vmul.f32 %v2975, %v2776
  %v3064 = vmul.f32 %v2975, %v2639
  %v3065 = vmul.f32 %v2979, %v2937
  %v3066 = vmul.f32 %v2979, %v2777
  %v3067 = vmul.f32 %v2979, %v2778
  %v3068 = vmul.f32 %v2979, %v2779
  %v3069 = vmul.f32 %v2979, %v2780
  %v3070 = vmul.f32 %v2979, %v2781
  %v3071 = vmul.f32 %v2979, %v2651
  %v3072 = vmul.f32 %v2983, %v2938
  %v3073 = vmul.f32 %v2983, %v2782
  %v3074 = vmul.f32 %v2983, %v2783
  %v3075 = vmul.f32 %v2983, %v2784
  %v3076 = vmul.f32 %v2983, %v2785
  %v3077 = vmul.f32 %v2983, %v2786
  %v3078 = vmul.f32 %v2983, %v2663
  %v3079 = vmul.f32 %v2987, %v2939
  %v3080 = vmul.f32 %v2987, %v2787
  %v3081 = vmul.f32 %v2987, %v2788
  %v3082 = vmul.f32 %v2987, %v2789
  %v3083 = vmul.f32 %v2987, %v2790
  %v3084 = vmul.f32 %v2987, %v2791
  %v3085 = vmul.f32 %v2987, %v2675
  %v3086 = vmul.f32 %v2991, %v2940
  %v3087 = vmul.f32 %v2991, %v2792
  %v3088 = vmul.f32 %v2991, %v2793
  %v3089 = vmul.f32 %v2991, %v2794
  %v3090 = vmul.f32 %v2991, %v2795
  %v3091 = vmul.f32 %v2991, %v2796
  %v3092 = vmul.f32 %v2991, %v2687
  %v3093 = vmul.f32 %v2995, %v2941
  %v3094 = vmul.f32 %v2995, %v2797
  %v3095 = vmul.f32 %v2995, %v2798
  %v3096 = vmul.f32 %v2995, %v2799
  %v3097 = vmul.f32 %v2995, %v2800
  %v3098 = vmul.f32 %v2995, %v2801
  %v3099 = vmul.f32 %v2995, %v2699
  %v3100 = vmul.f32 %v2999, %v2942
  %v3101 = vmul.f32 %v2999, %v2802
  %v3102 = vmul.f32 %v2999, %v2803
  %v3103 = vmul.f32 %v2999, %v2804
  %v3104 = vmul.f32 %v2999, %v2805
  %v3105 = vmul.f32 %v2999, %v2806
  %v3106 = vmul.f32 %v2999, %v2711
  %v3107 = vmul.f32 %v3003, %v2943
  %v3108 = vmul.f32 %v3003, %v2807
  %v3109 = vmul.f32 %v3003, %v2808
  %v3110 = vmul.f32 %v3003, %v2809
  %v3111 = vmul.f32 %v3003, %v2810
  %v3112 = vmul.f32 %v3003, %v2811
  %v3113 = vmul.f32 %v3003, %v2723
  %v3114 = vmul.f32 %v3007, %v2944
  %v3115 = vmul.f32 %v3007, %v2812
  %v3116 = vmul.f32 %v3007, %v2813
  %v3117 = vmul.f32 %v3007, %v2814
  %v3118 = vmul.f32 %v3007, %v2815
  %v3119 = vmul.f32 %v3007, %v2816
  %v3120 = vmul.f32 %v3007, %v2735
  %v3121 = vadd.f32 %v2335, %v3009
  %v3122 = vadd.f32 %v2336, %v3010
  %v3123 = vadd.f32 %v2337, %v3011
  %v3124 = vadd.f32 %v2338, %v3012
  %v3125 = vadd.f32 %v2339, %v3013
  %v3126 = vadd.f32 %v2340, %v3014
  %v3127 = vadd.f32 %v2341, %v3015
  %v3128 = vadd.f32 %v2342, %v3016
  %v3129 = vadd.f32 %v2343, %v3017
  %v3130 = vadd.f32 %v2344, %v3018
  %v3131 = vadd.f32 %v2345, %v3019
  %v3132 = vadd.f32 %v2346, %v3020
  %v3133 = vadd.f32 %v2347, %v3021
  %v3134 = vadd.f32 %v2348, %v3022
  %v3135 = vadd.f32 %v2349, %v3023
  %v3136 = vadd.f32 %v2350, %v3024
  %v3137 = vadd.f32 %v2351, %v3025
  %v3138 = vadd.f32 %v2352, %v3026
  %v3139 = vadd.f32 %v2353, %v3027
  %v3140 = vadd.f32 %v2354, %v3028
  %v3141 = vadd.f32 %v2355, %v3029
  %v3142 = vadd.f32 %v2356, %v3030
  %v3143 = vadd.f32 %v2357, %v3031
  %v3144 = vadd.f32 %v2358, %v3032
  %v3145 = vadd.f32 %v2359, %v3033
  %v3146 = vadd.f32 %v2360, %v3034
  %v3147 = vadd.f32 %v2361, %v3035
  %v3148 = vadd.f32 %v2362, %v3036
  %v3149 = vadd.f32 %v2363, %v3037
  %v3150 = vadd.f32 %v2364, %v3038
  %v3151 = vadd.f32 %v2365, %v3039
  %v3152 = vadd.f32 %v2366, %v3040
  %v3153 = vadd.f32 %v2367, %v3041
  %v3154 = vadd.f32 %v2368, %v3042
  %v3155 = vadd.f32 %v2369, %v3043
  %v3156 = vadd.f32 %v2370, %v3044
  %v3157 = vadd.f32 %v2371, %v3045
  %v3158 = vadd.f32 %v2372, %v3046
  %v3159 = vadd.f32 %v2373, %v3047
  %v3160 = vadd.f32 %v2374, %v3048
  %v3161 = vadd.f32 %v2375, %v3049
  %v3162 = vadd.f32 %v2376, %v3050
  %v3163 = vadd.f32 %v2377, %v3051
  %v3164 = vadd.f32 %v2378, %v3052
  %v3165 = vadd.f32 %v2379, %v3053
  %v3166 = vadd.f32 %v2380, %v3054
  %v3167 = vadd.f32 %v2381, %v3055
  %v3168 = vadd.f32 %v2382, %v3056
  %v3169 = vadd.f32 %v2383, %v3057
  %v3170 = vadd.f32 %v2384, %v3058
  %v3171 = vadd.f32 %v2385, %v3059
  %v3172 = vadd.f32 %v2386, %v3060
  %v3173 = vadd.f32 %v2387, %v3061
  %v3174 = vadd.f32 %v2388, %v3062
  %v3175 = vadd.f32 %v2389, %v3063
  %v3176 = vadd.f32 %v2390, %v3064
  %v3177 = vadd.f32 %v2391, %v3065
  %v3178 = vadd.f32 %v2392, %v3066
  %v3179 = vadd.f32 %v2393, %v3067
  %v3180 = vadd.f32 %v2394, %v3068
  %v3181 = vadd.f32 %v2395, %v3069
  %v3182 = vadd.f32 %v2396, %v3070
  %v3183 = vadd.f32 %v2397, %v3071
  %v3184 = vadd.f32 %v2398, %v3072
  %v3185 = vadd.f32 %v2399, %v3073
  %v3186 = vadd.f32 %v2400, %v3074
  %v3187 = vadd.f32 %v2401, %v3075
  %v3188 = vadd.f32 %v2402, %v3076
  %v3189 = vadd.f32 %v2403, %v3077
  %v3190 = vadd.f32 %v2404, %v3078
  %v3191 = vadd.f32 %v2405, %v3079
  %v3192 = vadd.f32 %v2406, %v3080
  %v3193 = vadd.f32 %v2407, %v3081
  %v3194 = vadd.f32 %v2408, %v3082
  %v3195 = vadd.f32 %v2409, %v3083
  %v3196 = vadd.f32 %v2410, %v3084
  %v3197 = vadd.f32 %v2411, %v3085
  %v3198 = vadd.f32 %v2412, %v3086
  %v3199 = vadd.f32 %v2413, %v3087
  %v3200 = vadd.f32 %v2414, %v3088
  %v3201 = vadd.f32 %v2415, %v3089
  %v3202 = vadd.f32 %v2416, %v3090
  %v3203 = vadd.f32 %v2417, %v3091
  %v3204 = vadd.f32 %v2418, %v3092
  %v3205 = vadd.f32 %v2419, %v3093
  %v3206 = vadd.f32 %v2420, %v3094
  %v3207 = vadd.f32 %v2421, %v3095
  %v3208 = vadd.f32 %v2422, %v3096
  %v3209 = vadd.f32 %v2423, %v3097
  %v3210 = vadd.f32 %v2424, %v3098
  %v3211 = vadd.f32 %v2425, %v3099
  %v3212 = vadd.f32 %v2426, %v3100
  %v3213 = vadd.f32 %v2427, %v3101
  %v3214 = vadd.f32 %v2428, %v3102
  %v3215 = vadd.f32 %v2429, %v3103
  %v3216 = vadd.f32 %v2430, %v3104
  %v3217 = vadd.f32 %v2431, %v3105
  %v3218 = vadd.f32 %v2432, %v3106
  %v3219 = vadd.f32 %v2433, %v3107
  %v3220 = vadd.f32 %v2434, %v3108
  %v3221 = vadd.f32 %v2435, %v3109
  %v3222 = vadd.f32 %v2436, %v3110
  %v3223 = vadd.f32 %v2437, %v3111
  %v3224 = vadd.f32 %v2438, %v3112
  %v3225 = vadd.f32 %v2439, %v3113
  %v3226 = vadd.f32 %v2440, %v3114
  %v3227 = vadd.f32 %v2441, %v3115
  %v3228 = vadd.f32 %v2442, %v3116
  %v3229 = vadd.f32 %v2443, %v3117
  %v3230 = vadd.f32 %v2444, %v3118
  %v3231 = vadd.f32 %v2445, %v3119
  %v3232 = vadd.f32 %v2446, %v3120
  %3233 = vst [vmem:[%s3] sm:$0xff] %v3121
  %3234 = vst [vmem:[%s3 + $0x8] sm:$0xff] %v3122
  %3235 = vst [vmem:[%s3 + $0x10] sm:$0xff] %v3123
  %3236 = vst [vmem:[%s3 + $0x18] sm:$0xff] %v3124
  %3237 = vst [vmem:[%s3 + $0x20] sm:$0xff] %v3125
  %3238 = vst [vmem:[%s3 + $0x28] sm:$0xff] %v3126
  %vm3239 = vcmask 130048
  %3240 = vst.msk [vmem:[%s3 + $0x30] sm:$0xff] %vm3239, %v3127
  %3241 = vst [vmem:[%s3 + $0x38] sm:$0xff] %v3128
  %3242 = vst [vmem:[%s3 + $0x40] sm:$0xff] %v3129
  %3243 = vst [vmem:[%s3 + $0x48] sm:$0xff] %v3130
  %3244 = vst [vmem:[%s3 + $0x50] sm:$0xff] %v3131
  %3245 = vst [vmem:[%s3 + $0x58] sm:$0xff] %v3132
  %3246 = vst [vmem:[%s3 + $0x60] sm:$0xff] %v3133
  %3247 = vst.msk [vmem:[%s3 + $0x68] sm:$0xff] %vm3239, %v3134
  %3248 = vst [vmem:[%s3 + $0x70] sm:$0xff] %v3135
  %3249 = vst [vmem:[%s3 + $0x78] sm:$0xff] %v3136
  %3250 = vst [vmem:[%s3 + $0x80] sm:$0xff] %v3137
  %3251 = vst [vmem:[%s3 + $0x88] sm:$0xff] %v3138
  %3252 = vst [vmem:[%s3 + $0x90] sm:$0xff] %v3139
  %3253 = vst [vmem:[%s3 + $0x98] sm:$0xff] %v3140
  %3254 = vst.msk [vmem:[%s3 + $0xa0] sm:$0xff] %vm3239, %v3141
  %3255 = vst [vmem:[%s3 + $0xa8] sm:$0xff] %v3142
  %3256 = vst [vmem:[%s3 + $0xb0] sm:$0xff] %v3143
  %3257 = vst [vmem:[%s3 + $0xb8] sm:$0xff] %v3144
  %3258 = vst [vmem:[%s3 + $0xc0] sm:$0xff] %v3145
  %3259 = vst [vmem:[%s3 + $0xc8] sm:$0xff] %v3146
  %3260 = vst [vmem:[%s3 + $0xd0] sm:$0xff] %v3147
  %3261 = vst.msk [vmem:[%s3 + $0xd8] sm:$0xff] %vm3239, %v3148
  %3262 = vst [vmem:[%s3 + $0xe0] sm:$0xff] %v3149
  %3263 = vst [vmem:[%s3 + $0xe8] sm:$0xff] %v3150
  %3264 = vst [vmem:[%s3 + $0xf0] sm:$0xff] %v3151
  %3265 = vst [vmem:[%s3 + $0xf8] sm:$0xff] %v3152
  %3266 = vst [vmem:[%s3 + $0x100] sm:$0xff] %v3153
  %3267 = vst [vmem:[%s3 + $0x108] sm:$0xff] %v3154
  %3268 = vst.msk [vmem:[%s3 + $0x110] sm:$0xff] %vm3239, %v3155
  %3269 = vst [vmem:[%s3 + $0x118] sm:$0xff] %v3156
  %3270 = vst [vmem:[%s3 + $0x120] sm:$0xff] %v3157
  %3271 = vst [vmem:[%s3 + $0x128] sm:$0xff] %v3158
  %3272 = vst [vmem:[%s3 + $0x130] sm:$0xff] %v3159
  %3273 = vst [vmem:[%s3 + $0x138] sm:$0xff] %v3160
  %3274 = vst [vmem:[%s3 + $0x140] sm:$0xff] %v3161
  %3275 = vst.msk [vmem:[%s3 + $0x148] sm:$0xff] %vm3239, %v3162
  %3276 = vst [vmem:[%s3 + $0x150] sm:$0xff] %v3163
  %3277 = vst [vmem:[%s3 + $0x158] sm:$0xff] %v3164
  %3278 = vst [vmem:[%s3 + $0x160] sm:$0xff] %v3165
  %3279 = vst [vmem:[%s3 + $0x168] sm:$0xff] %v3166
  %3280 = vst [vmem:[%s3 + $0x170] sm:$0xff] %v3167
  %3281 = vst [vmem:[%s3 + $0x178] sm:$0xff] %v3168
  %3282 = vst.msk [vmem:[%s3 + $0x180] sm:$0xff] %vm3239, %v3169
  %3283 = vst [vmem:[%s3 + $0x188] sm:$0xff] %v3170
  %3284 = vst [vmem:[%s3 + $0x190] sm:$0xff] %v3171
  %3285 = vst [vmem:[%s3 + $0x198] sm:$0xff] %v3172
  %3286 = vst [vmem:[%s3 + $0x1a0] sm:$0xff] %v3173
  %3287 = vst [vmem:[%s3 + $0x1a8] sm:$0xff] %v3174
  %3288 = vst [vmem:[%s3 + $0x1b0] sm:$0xff] %v3175
  %3289 = vst.msk [vmem:[%s3 + $0x1b8] sm:$0xff] %vm3239, %v3176
  %3290 = vst [vmem:[%s3 + $0x1c0] sm:$0xff] %v3177
  %3291 = vst [vmem:[%s3 + $0x1c8] sm:$0xff] %v3178
  %3292 = vst [vmem:[%s3 + $0x1d0] sm:$0xff] %v3179
  %3293 = vst [vmem:[%s3 + $0x1d8] sm:$0xff] %v3180
  %3294 = vst [vmem:[%s3 + $0x1e0] sm:$0xff] %v3181
  %3295 = vst [vmem:[%s3 + $0x1e8] sm:$0xff] %v3182
  %3296 = vst.msk [vmem:[%s3 + $0x1f0] sm:$0xff] %vm3239, %v3183
  %3297 = vst [vmem:[%s3 + $0x1f8] sm:$0xff] %v3184
  %3298 = vst [vmem:[%s3 + $0x200] sm:$0xff] %v3185
  %3299 = vst [vmem:[%s3 + $0x208] sm:$0xff] %v3186
  %3300 = vst [vmem:[%s3 + $0x210] sm:$0xff] %v3187
  %3301 = vst [vmem:[%s3 + $0x218] sm:$0xff] %v3188
  %3302 = vst [vmem:[%s3 + $0x220] sm:$0xff] %v3189
  %3303 = vst.msk [vmem:[%s3 + $0x228] sm:$0xff] %vm3239, %v3190
  %3304 = vst [vmem:[%s3 + $0x230] sm:$0xff] %v3191
  %3305 = vst [vmem:[%s3 + $0x238] sm:$0xff] %v3192
  %3306 = vst [vmem:[%s3 + $0x240] sm:$0xff] %v3193
  %3307 = vst [vmem:[%s3 + $0x248] sm:$0xff] %v3194
  %3308 = vst [vmem:[%s3 + $0x250] sm:$0xff] %v3195
  %3309 = vst [vmem:[%s3 + $0x258] sm:$0xff] %v3196
  %3310 = vst.msk [vmem:[%s3 + $0x260] sm:$0xff] %vm3239, %v3197
  %3311 = vst [vmem:[%s3 + $0x268] sm:$0xff] %v3198
  %3312 = vst [vmem:[%s3 + $0x270] sm:$0xff] %v3199
  %3313 = vst [vmem:[%s3 + $0x278] sm:$0xff] %v3200
  %3314 = vst [vmem:[%s3 + $0x280] sm:$0xff] %v3201
  %3315 = vst [vmem:[%s3 + $0x288] sm:$0xff] %v3202
  %3316 = vst [vmem:[%s3 + $0x290] sm:$0xff] %v3203
  %3317 = vst.msk [vmem:[%s3 + $0x298] sm:$0xff] %vm3239, %v3204
  %3318 = vst [vmem:[%s3 + $0x2a0] sm:$0xff] %v3205
  %3319 = vst [vmem:[%s3 + $0x2a8] sm:$0xff] %v3206
  %3320 = vst [vmem:[%s3 + $0x2b0] sm:$0xff] %v3207
  %3321 = vst [vmem:[%s3 + $0x2b8] sm:$0xff] %v3208
  %3322 = vst [vmem:[%s3 + $0x2c0] sm:$0xff] %v3209
  %3323 = vst [vmem:[%s3 + $0x2c8] sm:$0xff] %v3210
  %3324 = vst.msk [vmem:[%s3 + $0x2d0] sm:$0xff] %vm3239, %v3211
  %3325 = vst [vmem:[%s3 + $0x2d8] sm:$0xff] %v3212
  %3326 = vst [vmem:[%s3 + $0x2e0] sm:$0xff] %v3213
  %3327 = vst [vmem:[%s3 + $0x2e8] sm:$0xff] %v3214
  %3328 = vst [vmem:[%s3 + $0x2f0] sm:$0xff] %v3215
  %3329 = vst [vmem:[%s3 + $0x2f8] sm:$0xff] %v3216
  %3330 = vst [vmem:[%s3 + $0x300] sm:$0xff] %v3217
  %3331 = vst.msk [vmem:[%s3 + $0x308] sm:$0xff] %vm3239, %v3218
  %3332 = vst [vmem:[%s3 + $0x310] sm:$0xff] %v3219
  %3333 = vst [vmem:[%s3 + $0x318] sm:$0xff] %v3220
  %3334 = vst [vmem:[%s3 + $0x320] sm:$0xff] %v3221
  %3335 = vst [vmem:[%s3 + $0x328] sm:$0xff] %v3222
  %3336 = vst [vmem:[%s3 + $0x330] sm:$0xff] %v3223
  %3337 = vst [vmem:[%s3 + $0x338] sm:$0xff] %v3224
  %3338 = vst.msk [vmem:[%s3 + $0x340] sm:$0xff] %vm3239, %v3225
  %3339 = vst [vmem:[%s3 + $0x348] sm:$0xff] %v3226
  %3340 = vst [vmem:[%s3 + $0x350] sm:$0xff] %v3227
  %3341 = vst [vmem:[%s3 + $0x358] sm:$0xff] %v3228
  %3342 = vst [vmem:[%s3 + $0x360] sm:$0xff] %v3229
  %3343 = vst [vmem:[%s3 + $0x368] sm:$0xff] %v3230
  %3344 = vst [vmem:[%s3 + $0x370] sm:$0xff] %v3231
  %3345 = vst.msk [vmem:[%s3 + $0x378] sm:$0xff] %vm3239, %v3232
  // Predicated region
  $region14: #{kernel_generated_1_forward.1} parent=0 // pred_check
    _
  $region15: #{kernel_generated_1_forward.1} parent=0 // pred_check_branch
    %3347 = sbr.rel (0) target = $region17
  $region16: #{kernel_generated_1_forward.1} parent=0 // pred_region
    _
  $region17: #{kernel_generated_1_forward.1} parent=0 // pred_fallthru
    _
  // Predicated region
  $region18: #{kernel_generated_1_forward.1} parent=0 // pred_check
    _
  $region19: #{kernel_generated_1_forward.1} parent=0 // pred_check_branch
    %3349 = sbr.rel (0) target = $region21
  $region20: #{kernel_generated_1_forward.1} parent=0 // pred_region
    _
  $region21: #{kernel_generated_1_forward.1} parent=0 // pred_fallthru
    _

</llo_original>
